<compile_context>
chip_gen: v6e
topology: v6e:2x2x1
jax: 0.10.0
libtpu: 0.0.40
codegen_flags: <defaults>
</compile_context>

<pallas_src>
import functools

import jax
import jax.numpy as jnp
from jax.experimental import pallas as pl
from jax.experimental.pallas import tpu as pltpu


# Sub-pixel taps for a k=3, s=2, p=1, op=1 transposed conv:
#   output parity -> ((kernel tap k, coarse input shift delta), ...)
_TAPS = {0: ((1, 0),), 1: ((2, 0), (0, 1))}


# ------------------------------ fused kernel ------------------------------- #

def _fused_kernel(cols_ref, w1_ref, w2p00_ref, w2p01_ref, w2p10_ref,
                  w2p11_ref, w3e_ref, out_ref, p_scr, d1_scr, *, PH, PW):
    """Whole DenoiserAutoencoder forward for one batch element, all in VMEM.

    cols_ref : (1, 4*PB, 27) bf16  conv1 im2col, rows grouped by pool phase
    w1_ref   : (27, 64)      bf16  conv1 weight, K ordered (ci, kh, kw)
    w2p*_ref : (K, 128)      bf16  deconv1 weights, K-stacked per output phase
    w3e_ref  : (9, 48, 128)  bf16  deconv2 effective weights per d1 window
    out_ref  : (1, 48, PB)   f32   48 = 16 sub-pixel phases x 3 channels
    p_scr    : (PB+PW+1, 64)     bf16 scratch: pooled activ. + zero pad rows
    d1_scr   : (4, PB+PW+1, 128) bf16 scratch: deconv1 phases + zero pad rows
    """
    PB = PH * PW
    f32 = jnp.float32
    bf16 = jnp.bfloat16

    # Rows whose within-row position b == PW-1 (right border) must be zeroed
    # in any column-shifted window.
    row_ids = jax.lax.broadcasted_iota(jnp.int32, (PB, 1), 0)
    col_ok = (row_ids % PW) != (PW - 1)

    # ---- encoder: Conv2d(3->64, k3, s2, p1) + ReLU (single K=27 matmul) ----
    h = jnp.dot(cols_ref[0], w1_ref[...], preferred_element_type=f32)
    h = jnp.maximum(h, 0.0)                                   # (4*PB, 64) f32

    # ---- encoder: MaxPool2d(2,2) -- the 4 pool corners are contiguous row
    # blocks thanks to the phase-grouped im2col row order.
    p = jnp.maximum(jnp.maximum(h[0:PB], h[PB:2 * PB]),
                    jnp.maximum(h[2 * PB:3 * PB], h[3 * PB:4 * PB]))

    # Pooled activations into a zero-padded scratch so every shifted window is
    # a plain static slice (no concatenate copies), already bf16 for the MXU.
    p_scr[0:PB, :] = p.astype(bf16)
    p_scr[PB:PB + PW + 1, :] = jnp.zeros((PW + 1, 64), bf16)

    def p_window(dh, dw):
        s = dh * PW + dw
        w = p_scr[s:s + PB, :]
        if dw:
            w = jnp.where(col_ok, w, jnp.zeros_like(w))
        return w

    # ---- decoder 1: ConvTranspose2d(64->128, k3, s2, p1, op1) --------------
    # Sub-pixel decomposition; each output phase's taps are stacked along K so
    # one matmul per phase (K = 64 / 128 / 128 / 256) replaces 9 K=64 matmuls.
    win00 = p_window(0, 0)
    win01 = p_window(0, 1)
    win10 = p_window(1, 0)
    win11 = p_window(1, 1)

    d1_00 = jnp.dot(win00, w2p00_ref[...], preferred_element_type=f32)
    d1_01 = jnp.dot(jnp.concatenate([win00, win01], axis=1),
                    w2p01_ref[...], preferred_element_type=f32)
    d1_10 = jnp.dot(jnp.concatenate([win00, win10], axis=1),
                    w2p10_ref[...], preferred_element_type=f32)
    d1_11 = jnp.dot(jnp.concatenate([win00, win01, win10, win11], axis=1),
                    w2p11_ref[...], preferred_element_type=f32)

    # Store the 4 phases into a zero-padded scratch (one window at a time is
    # sliced out of this below -- no 16-copy d1w dict).
    for idx, d1_phase in enumerate((d1_00, d1_01, d1_10, d1_11)):
        d1_scr[idx, 0:PB, :] = d1_phase.astype(bf16)
        d1_scr[idx, PB:PB + PW + 1, :] = jnp.zeros((PW + 1, 128), bf16)

    # ---- decoder 2: ConvTranspose2d(128->3) + Sigmoid ----------------------
    # 9 distinct d1 windows; each contributes one (48,128)@(128,PB) matmul to
    # the (48, PB) output slab.  Only one window is materialized at a time.
    acc = jnp.zeros((48, PB), f32)
    for th in range(3):
        for tw in range(3):
            pidx = (th % 2) * 2 + (tw % 2)
            s = (th // 2) * PW + (tw // 2)
            win = d1_scr[pidx, s:s + PB, :]
            if tw // 2:
                win = jnp.where(col_ok, win, jnp.zeros_like(win))
            acc = acc + jax.lax.dot_general(
                w3e_ref[th * 3 + tw], win, (((1,), (1,)), ((), ())),
                preferred_element_type=f32)

    # sigmoid: exp and (approx) reciprocal both run on the EUP
    out_ref[0, :, :] = pl.reciprocal(1.0 + jnp.exp(-acc), approx=True)


# ------------------------------- JAX wrapper -------------------------------- #

def _conv1_cols_phased(x_nchw):
    """im2col for Conv2d(3,64,k3,s2,p1), rows grouped by 2x2 pool phase.

    Returns (N, 4*PH*PW, 27); row ((2u+v)*PH*PW + a*PW + b) holds the patch of
    conv-output position (oh, ow) = (2a+u, 2b+v); K is ordered (ci, kh, kw).
    """
    N, C, H, W = x_nchw.shape
    OH, OW = H // 2, W // 2
    PH, PW = OH // 2, OW // 2
    xp = jnp.pad(x_nchw, ((0, 0), (0, 0), (1, 1), (1, 1)))
    taps = []
    for kh in range(3):
        for kw in range(3):
            taps.append(xp[:, :, kh:kh + 2 * OH:2, kw:kw + 2 * OW:2])
    t = jnp.stack(taps, axis=2)                     # (N, C, 9, OH, OW)
    t = jnp.transpose(t, (0, 3, 4, 1, 2))           # (N, OH, OW, C, 9)
    t = t.reshape(N, PH, 2, PW, 2, C * 9)           # oh=(a,u), ow=(b,v)
    t = jnp.transpose(t, (0, 2, 4, 1, 3, 5))        # (N, u, v, a, b, K)
    return t.reshape(N, 4 * PH * PW, C * 9)


def _deconv1_phase_weights(w2):
    """K-stacked deconv1 weights, one per output sub-pixel phase.

    Row blocks are ordered to match the kernel's window stacking
    [win00 | win01 | win10 | win11].
    """
    w2t = jnp.transpose(w2, (2, 3, 0, 1))           # (kh, kw, cin=64, cout=128)
    w00 = w2t[1, 1]                                               # (64, 128)
    w01 = jnp.concatenate([w2t[1, 2], w2t[1, 0]], axis=0)         # (128, 128)
    w10 = jnp.concatenate([w2t[2, 1], w2t[0, 1]], axis=0)         # (128, 128)
    w11 = jnp.concatenate([w2t[2, 2], w2t[2, 0],
                           w2t[0, 2], w2t[0, 0]], axis=0)         # (256, 128)
    return w00, w01, w10, w11


def _deconv2_effective_weights(w3):
    """(9, 48, 128): one effective deconv2 weight per distinct d1 window.

    Rows = 16 output sub-pixel phases x 3 channels; each (3,128) block is the
    tap that phase takes from that window, or zero if the phase doesn't use it.
    """
    w3t = jnp.transpose(w3, (2, 3, 1, 0))           # (kh, kw, cout=3, cin=128)
    cin = w3.shape[0]
    zero = jnp.zeros((3, cin), w3.dtype)
    blocks = [[zero for _ in range(16)] for _ in range(9)]
    for ry in (0, 1):
        for cy in (0, 1):
            for rm in (0, 1):
                for cn in (0, 1):
                    pid = ((ry * 2 + cy) * 2 + rm) * 2 + cn
                    for kh, dh in _TAPS[ry]:
                        for kw, dw in _TAPS[cy]:
                            blocks[(rm + dh) * 3 + (cn + dw)][pid] = w3t[kh, kw]
    return jnp.stack([jnp.concatenate(b, axis=0) for b in blocks], axis=0)


def denoiser_forward(x_nchw, params):
    """Forward pass matching the PyTorch DenoiserAutoencoder (bias=False)."""
    w1, w2, w3 = params
    N, C, H, W = x_nchw.shape
    assert C == 3 and H % 4 == 0 and W % 4 == 0
    PH, PW = H // 4, W // 4
    PB = PH * PW
    bf16 = jnp.bfloat16

    # One-time layout plumbing (first-layer im2col + weight reshapes), bf16.
    cols1 = _conv1_cols_phased(x_nchw).astype(bf16)              # (N, 4*PB, 27)
    w1m = jnp.transpose(w1, (1, 2, 3, 0)).reshape(27, 64).astype(bf16)
    w2p00, w2p01, w2p10, w2p11 = (
        w.astype(bf16) for w in _deconv1_phase_weights(w2))
    w3e = _deconv2_effective_weights(w3).astype(bf16)            # (9, 48, 128)

    # Scoped-VMEM budget from the actual live set (double-buffered ins/outs +
    # scratch + in-kernel intermediates), capped below v7x's 64 MiB physical.
    bytes_in = 4 * PB * 128 * 2 + (32 * 128 + 576 * 128 + 9 * 48 * 128) * 2
    bytes_out = 48 * max(PB, 128) * 4
    bytes_scratch = (PB + PW + 1) * (64 + 4 * 128) * 2
    bytes_live = PB * (4 * 64 * 4 + 64 * 4 + 4 * 128 * 4 + 3 * 256 * 2 + 2 * 48 * 4)
    vmem_limit = int(min(2 * (bytes_in + bytes_out) + bytes_scratch
                         + 2 * bytes_live + (4 << 20), 48 << 20))

    out_raw = pl.pallas_call(
        functools.partial(_fused_kernel, PH=PH, PW=PW),
        out_shape=jax.ShapeDtypeStruct((N, 48, PB), jnp.float32),
        grid=(N,),
        in_specs=[
            pl.BlockSpec((1, 4 * PB, 27), lambda n: (n, 0, 0)),
            pl.BlockSpec((27, 64), lambda n: (0, 0)),
            pl.BlockSpec((64, 128), lambda n: (0, 0)),
            pl.BlockSpec((128, 128), lambda n: (0, 0)),
            pl.BlockSpec((128, 128), lambda n: (0, 0)),
            pl.BlockSpec((256, 128), lambda n: (0, 0)),
            pl.BlockSpec((9, 48, 128), lambda n: (0, 0, 0)),
        ],
        out_specs=pl.BlockSpec((1, 48, PB), lambda n: (n, 0, 0)),
        scratch_shapes=[
            pltpu.VMEM((PB + PW + 1, 64), bf16),
            pltpu.VMEM((4, PB + PW + 1, 128), bf16),
        ],
        compiler_params=pltpu.CompilerParams(
            dimension_semantics=("parallel",),
            vmem_limit_bytes=vmem_limit),
    )(cols1, w1m, w2p00, w2p01, w2p10, w2p11, w3e)

    # Un-shuffle the 16 sub-pixel phases back to NCHW (tiny, pure layout).
    y = out_raw.reshape(N, 2, 2, 2, 2, 3, PH, PW)   # [n,ry,cy,rm,cn,ch,a,b]
    y = jnp.transpose(y, (0, 5, 6, 3, 1, 7, 4, 2))  # [n,ch,a,rm,ry,b,cn,cy]
    return y.reshape(N, 3, 4 * PH, 4 * PW)


# ---------------------------- reference / params ---------------------------- #

def reference_forward(x, params):
    """Pure-XLA f32 reference (same math as the PyTorch module)."""
    w1, w2, w3 = params
    dn = ("NCHW", "OIHW", "NCHW")
    h = jax.lax.conv_general_dilated(x, w1, (2, 2), ((1, 1), (1, 1)),
                                     dimension_numbers=dn)
    h = jnp.maximum(h, 0.0)
    p = jnp.maximum(jnp.maximum(h[:, :, 0::2, 0::2], h[:, :, 0::2, 1::2]),
                    jnp.maximum(h[:, :, 1::2, 0::2], h[:, :, 1::2, 1::2]))

    def deconv(y, w):   # ConvTranspose2d(k=3, s=2, p=1, op=1, bias=False)
        wc = jnp.transpose(w, (1, 0, 2, 3))[:, :, ::-1, ::-1]
        return jax.lax.conv_general_dilated(
            y, wc, (1, 1), ((1, 2), (1, 2)), lhs_dilation=(2, 2),
            dimension_numbers=dn)

    d1 = deconv(p, w2)
    d2 = deconv(d1, w3)
    return jax.nn.sigmoid(d2)


def init_params():
    """Deterministic synthetic weights (shapes match the PyTorch module)."""
    k1, k2, k3 = jax.random.split(jax.random.PRNGKey(42), 3)
    # Conv2d weight: (out, in, kH, kW)
    w1 = jax.random.uniform(k1, (64, 3, 3, 3), jnp.float32, -1.0, 1.0) / jnp.sqrt(3.0 * 9)
    # ConvTranspose2d weight: (in, out, kH, kW)
    w2 = jax.random.uniform(k2, (64, 128, 3, 3), jnp.float32, -1.0, 1.0) / jnp.sqrt(64.0 * 9)
    w3 = jax.random.uniform(k3, (128, 3, 3, 3), jnp.float32, -1.0, 1.0) / jnp.sqrt(128.0 * 9)
    return (w1, w2, w3)


if __name__ == "__main__":
    x = jax.random.normal(jax.random.PRNGKey(0), (2, 3, 16, 16), jnp.float32)
    params = init_params()

    out = jax.jit(denoiser_forward)(x, params)
    out = jax.block_until_ready(out)

    assert out.shape == (2, 3, 16, 16), out.shape
    assert out.dtype == jnp.float32

    # Correctness vs. the pure-XLA f32 reference; tolerance covers bf16 matmul
    # operands (f32 accumulation) plus the approx reciprocal in the sigmoid.
    ref = reference_forward(x, params)
    max_err = float(jnp.max(jnp.abs(out - ref)))
    assert max_err < 1e-2, max_err

    print("KERNEL_OK")
</pallas_src>

<mosaic_0001>
module attributes {stable_mosaic.version = 11 : i64} {
  func.func @_fused_kernel(%arg0: i32, %arg1: memref<1x64x27xbf16, #tpu.memory_space<vmem>>, %arg2: memref<27x64xbf16, #tpu.memory_space<vmem>>, %arg3: memref<64x128xbf16, #tpu.memory_space<vmem>>, %arg4: memref<128x128xbf16, #tpu.memory_space<vmem>>, %arg5: memref<128x128xbf16, #tpu.memory_space<vmem>>, %arg6: memref<256x128xbf16, #tpu.memory_space<vmem>>, %arg7: memref<9x48x128xbf16, #tpu.memory_space<vmem>>, %arg8: memref<1x48x16xf32, #tpu.memory_space<vmem>>, %arg9: memref<21x64xbf16, #tpu.memory_space<vmem>>, %arg10: memref<4x21x128xbf16, #tpu.memory_space<vmem>>) attributes {dimension_semantics = [#tpu.dimension_semantics<parallel>], iteration_bounds = array<i64: 2>, scalar_prefetch = 0 : i64, scratch_operands = 2 : i64, tpu.core_type = #tpu.core_type<tc>, window_params = [{transform_indices = @transform_0, window_bounds = array<i64: 1, 64, 27>}, {pipeline_mode = #tpu.pipeline_mode<synchronous>, transform_indices = @transform_1, window_bounds = array<i64: 27, 64>}, {pipeline_mode = #tpu.pipeline_mode<synchronous>, transform_indices = @transform_2, window_bounds = array<i64: 64, 128>}, {pipeline_mode = #tpu.pipeline_mode<synchronous>, transform_indices = @transform_3, window_bounds = array<i64: 128, 128>}, {pipeline_mode = #tpu.pipeline_mode<synchronous>, transform_indices = @transform_4, window_bounds = array<i64: 128, 128>}, {pipeline_mode = #tpu.pipeline_mode<synchronous>, transform_indices = @transform_5, window_bounds = array<i64: 256, 128>}, {pipeline_mode = #tpu.pipeline_mode<synchronous>, transform_indices = @transform_6, window_bounds = array<i64: 9, 48, 128>}, {transform_indices = @transform_7, window_bounds = array<i64: 1, 48, 16>}]} {
    %0 = tpu.iota {dimensions = array<i32: 0>} : vector<16x1xi32>
    %c4_i32 = arith.constant 4 : i32
    %c0_i32 = arith.constant 0 : i32
    %1 = arith.cmpi eq, %c4_i32, %c0_i32 : i32
    %c1_i32 = arith.constant 1 : i32
    %2 = arith.select %1, %c1_i32, %c4_i32 : i32
    %3 = vector.broadcast %2 : i32 to vector<16x1xi32>
    %4 = arith.remsi %0, %3 : vector<16x1xi32>
    %c0_i32_0 = arith.constant 0 : i32
    %5 = vector.broadcast %c0_i32_0 : i32 to vector<16x1xi32>
    %6 = arith.cmpi ne, %4, %5 : vector<16x1xi32>
    %c0_i32_1 = arith.constant 0 : i32
    %7 = vector.broadcast %c0_i32_1 : i32 to vector<16x1xi32>
    %8 = arith.cmpi slt, %4, %7 : vector<16x1xi32>
    %c0_i32_2 = arith.constant 0 : i32
    %9 = arith.cmpi slt, %2, %c0_i32_2 : i32
    %10 = vector.broadcast %9 : i1 to vector<16x1xi1>
    %11 = vector.broadcast %10 : vector<16x1xi1> to vector<16x1xi1>
    %12 = arith.xori %8, %11 : vector<16x1xi1>
    %13 = arith.andi %12, %6 : vector<16x1xi1>
    %14 = vector.broadcast %2 : i32 to vector<16x1xi32>
    %15 = arith.addi %4, %14 : vector<16x1xi32>
    %16 = arith.select %13, %15, %4 : vector<16x1xi1>, vector<16x1xi32>
    %c3_i32 = arith.constant 3 : i32
    %17 = vector.broadcast %c3_i32 : i32 to vector<16x1xi32>
    %18 = arith.cmpi ne, %16, %17 : vector<16x1xi32>
    %c0 = arith.constant 0 : index
    %c0_3 = arith.constant 0 : index
    %c0_4 = arith.constant 0 : index
    %19 = vector.load %arg1[%c0, %c0_3, %c0_4] : memref<1x64x27xbf16, #tpu.memory_space<vmem>>, vector<1x64x27xbf16>
    %20 = vector.shape_cast %19 : vector<1x64x27xbf16> to vector<64x27xbf16>
    %c0_5 = arith.constant 0 : index
    %c0_6 = arith.constant 0 : index
    %21 = vector.load %arg2[%c0_5, %c0_6] : memref<27x64xbf16, #tpu.memory_space<vmem>>, vector<27x64xbf16>
    %cst = arith.constant dense<0.000000e+00> : vector<64x64xf32>
    %22 = tpu.matmul %20, %21, %cst {dimension_numbers = #tpu.dot_dimension_numbers<[1], [0], [0], [1], [0, 0, 1, 1], [], []>} : vector<64x27xbf16>, vector<27x64xbf16>, vector<64x64xf32> -> vector<64x64xf32>
    %cst_7 = arith.constant 0.000000e+00 : f32
    %23 = vector.broadcast %cst_7 : f32 to vector<64x64xf32>
    %24 = arith.maximumf %22, %23 : vector<64x64xf32>
    %25 = vector.extract_strided_slice %24 {offsets = [0, 0], sizes = [16, 64], strides = [1, 1]} : vector<64x64xf32> to vector<16x64xf32>
    %26 = vector.extract_strided_slice %24 {offsets = [16, 0], sizes = [16, 64], strides = [1, 1]} : vector<64x64xf32> to vector<16x64xf32>
    %27 = arith.maximumf %25, %26 : vector<16x64xf32>
    %28 = vector.extract_strided_slice %24 {offsets = [32, 0], sizes = [16, 64], strides = [1, 1]} : vector<64x64xf32> to vector<16x64xf32>
    %29 = vector.extract_strided_slice %24 {offsets = [48, 0], sizes = [16, 64], strides = [1, 1]} : vector<64x64xf32> to vector<16x64xf32>
    %30 = arith.maximumf %28, %29 : vector<16x64xf32>
    %31 = arith.maximumf %27, %30 : vector<16x64xf32>
    %32 = arith.truncf %31 : vector<16x64xf32> to vector<16x64xbf16>
    %c0_8 = arith.constant 0 : index
    %c0_9 = arith.constant 0 : index
    %33 = vector.load %arg9[%c0_8, %c0_9] : memref<21x64xbf16, #tpu.memory_space<vmem>>, vector<16x64xbf16>
    tpu.vector_store %arg9[%c0_8, %c0_9], %32 {strides = array<i32>} : memref<21x64xbf16, #tpu.memory_space<vmem>>, vector<16x64xbf16>,
    %cst_10 = arith.constant 0.000000e+00 : bf16
    %34 = vector.broadcast %cst_10 : bf16 to vector<5x64xbf16>
    %c16 = arith.constant 16 : index
    %c0_11 = arith.constant 0 : index
    %35 = vector.load %arg9[%c16, %c0_11] : memref<21x64xbf16, #tpu.memory_space<vmem>>, vector<5x64xbf16>
    tpu.vector_store %arg9[%c16, %c0_11], %34 {strides = array<i32>} : memref<21x64xbf16, #tpu.memory_space<vmem>>, vector<5x64xbf16>,
    %c0_12 = arith.constant 0 : index
    %c0_13 = arith.constant 0 : index
    %36 = vector.load %arg9[%c0_12, %c0_13] : memref<21x64xbf16, #tpu.memory_space<vmem>>, vector<16x64xbf16>
    %c1 = arith.constant 1 : index
    %c0_14 = arith.constant 0 : index
    %37 = vector.load %arg9[%c1, %c0_14] : memref<21x64xbf16, #tpu.memory_space<vmem>>, vector<16x64xbf16>
    %cst_15 = arith.constant 0.000000e+00 : bf16
    %38 = vector.broadcast %cst_15 : bf16 to vector<16x64xbf16>
    %39 = vector.shape_cast %18 : vector<16x1xi1> to vector<16x1xi1>
    %40 = vector.broadcast %39 : vector<16x1xi1> to vector<16x64xi1>
    %41 = arith.select %40, %37, %38 : vector<16x64xi1>, vector<16x64xbf16>
    %c4 = arith.constant 4 : index
    %c0_16 = arith.constant 0 : index
    %42 = vector.load %arg9[%c4, %c0_16] : memref<21x64xbf16, #tpu.memory_space<vmem>>, vector<16x64xbf16>
    %c5 = arith.constant 5 : index
    %c0_17 = arith.constant 0 : index
    %43 = vector.load %arg9[%c5, %c0_17] : memref<21x64xbf16, #tpu.memory_space<vmem>>, vector<16x64xbf16>
    %cst_18 = arith.constant 0.000000e+00 : bf16
    %44 = vector.broadcast %cst_18 : bf16 to vector<16x64xbf16>
    %45 = vector.shape_cast %18 : vector<16x1xi1> to vector<16x1xi1>
    %46 = vector.broadcast %45 : vector<16x1xi1> to vector<16x64xi1>
    %47 = arith.select %46, %43, %44 : vector<16x64xi1>, vector<16x64xbf16>
    %c0_19 = arith.constant 0 : index
    %c0_20 = arith.constant 0 : index
    %48 = vector.load %arg3[%c0_19, %c0_20] : memref<64x128xbf16, #tpu.memory_space<vmem>>, vector<64x128xbf16>
    %cst_21 = arith.constant dense<0.000000e+00> : vector<16x128xf32>
    %49 = tpu.matmul %36, %48, %cst_21 {dimension_numbers = #tpu.dot_dimension_numbers<[1], [0], [0], [1], [0, 0, 1, 1], [], []>} : vector<16x64xbf16>, vector<64x128xbf16>, vector<16x128xf32> -> vector<16x128xf32>
    %50 = tpu.concatenate %36, %41 in 1 : vector<16x64xbf16>, vector<16x64xbf16> -> vector<16x128xbf16>
    %c0_22 = arith.constant 0 : index
    %c0_23 = arith.constant 0 : index
    %51 = vector.load %arg4[%c0_22, %c0_23] : memref<128x128xbf16, #tpu.memory_space<vmem>>, vector<128x128xbf16>
    %cst_24 = arith.constant dense<0.000000e+00> : vector<16x128xf32>
    %52 = tpu.matmul %50, %51, %cst_24 {dimension_numbers = #tpu.dot_dimension_numbers<[1], [0], [0], [1], [0, 0, 1, 1], [], []>} : vector<16x128xbf16>, vector<128x128xbf16>, vector<16x128xf32> -> vector<16x128xf32>
    %53 = tpu.concatenate %36, %42 in 1 : vector<16x64xbf16>, vector<16x64xbf16> -> vector<16x128xbf16>
    %c0_25 = arith.constant 0 : index
    %c0_26 = arith.constant 0 : index
    %54 = vector.load %arg5[%c0_25, %c0_26] : memref<128x128xbf16, #tpu.memory_space<vmem>>, vector<128x128xbf16>
    %cst_27 = arith.constant dense<0.000000e+00> : vector<16x128xf32>
    %55 = tpu.matmul %53, %54, %cst_27 {dimension_numbers = #tpu.dot_dimension_numbers<[1], [0], [0], [1], [0, 0, 1, 1], [], []>} : vector<16x128xbf16>, vector<128x128xbf16>, vector<16x128xf32> -> vector<16x128xf32>
    %56 = tpu.concatenate %36, %41, %42, %47 in 1 : vector<16x64xbf16>, vector<16x64xbf16>, vector<16x64xbf16>, vector<16x64xbf16> -> vector<16x256xbf16>
    %c0_28 = arith.constant 0 : index
    %c0_29 = arith.constant 0 : index
    %57 = vector.load %arg6[%c0_28, %c0_29] : memref<256x128xbf16, #tpu.memory_space<vmem>>, vector<256x128xbf16>
    %cst_30 = arith.constant dense<0.000000e+00> : vector<16x128xf32>
    %58 = tpu.matmul %56, %57, %cst_30 {dimension_numbers = #tpu.dot_dimension_numbers<[1], [0], [0], [1], [0, 0, 1, 1], [], []>} : vector<16x256xbf16>, vector<256x128xbf16>, vector<16x128xf32> -> vector<16x128xf32>
    %59 = arith.truncf %49 : vector<16x128xf32> to vector<16x128xbf16>
    %c0_31 = arith.constant 0 : index
    %c0_32 = arith.constant 0 : index
    %c0_33 = arith.constant 0 : index
    %60 = vector.load %arg10[%c0_31, %c0_32, %c0_33] : memref<4x21x128xbf16, #tpu.memory_space<vmem>>, vector<1x16x128xbf16>
    %61 = vector.shape_cast %60 : vector<1x16x128xbf16> to vector<16x128xbf16>
    %62 = vector.shape_cast %59 : vector<16x128xbf16> to vector<1x16x128xbf16>
    tpu.vector_store %arg10[%c0_31, %c0_32, %c0_33], %62 {strides = array<i32>} : memref<4x21x128xbf16, #tpu.memory_space<vmem>>, vector<1x16x128xbf16>,
    %cst_34 = arith.constant 0.000000e+00 : bf16
    %63 = vector.broadcast %cst_34 : bf16 to vector<5x128xbf16>
    %c0_35 = arith.constant 0 : index
    %c16_36 = arith.constant 16 : index
    %c0_37 = arith.constant 0 : index
    %64 = vector.load %arg10[%c0_35, %c16_36, %c0_37] : memref<4x21x128xbf16, #tpu.memory_space<vmem>>, vector<1x5x128xbf16>
    %65 = vector.shape_cast %64 : vector<1x5x128xbf16> to vector<5x128xbf16>
    %66 = vector.shape_cast %63 : vector<5x128xbf16> to vector<1x5x128xbf16>
    tpu.vector_store %arg10[%c0_35, %c16_36, %c0_37], %66 {strides = array<i32>} : memref<4x21x128xbf16, #tpu.memory_space<vmem>>, vector<1x5x128xbf16>,
    %67 = arith.truncf %52 : vector<16x128xf32> to vector<16x128xbf16>
    %c1_38 = arith.constant 1 : index
    %c0_39 = arith.constant 0 : index
    %c0_40 = arith.constant 0 : index
    %68 = vector.load %arg10[%c1_38, %c0_39, %c0_40] : memref<4x21x128xbf16, #tpu.memory_space<vmem>>, vector<1x16x128xbf16>
    %69 = vector.shape_cast %68 : vector<1x16x128xbf16> to vector<16x128xbf16>
    %70 = vector.shape_cast %67 : vector<16x128xbf16> to vector<1x16x128xbf16>
    tpu.vector_store %arg10[%c1_38, %c0_39, %c0_40], %70 {strides = array<i32>} : memref<4x21x128xbf16, #tpu.memory_space<vmem>>, vector<1x16x128xbf16>,
    %cst_41 = arith.constant 0.000000e+00 : bf16
    %71 = vector.broadcast %cst_41 : bf16 to vector<5x128xbf16>
    %c1_42 = arith.constant 1 : index
    %c16_43 = arith.constant 16 : index
    %c0_44 = arith.constant 0 : index
    %72 = vector.load %arg10[%c1_42, %c16_43, %c0_44] : memref<4x21x128xbf16, #tpu.memory_space<vmem>>, vector<1x5x128xbf16>
    %73 = vector.shape_cast %72 : vector<1x5x128xbf16> to vector<5x128xbf16>
    %74 = vector.shape_cast %71 : vector<5x128xbf16> to vector<1x5x128xbf16>
    tpu.vector_store %arg10[%c1_42, %c16_43, %c0_44], %74 {strides = array<i32>} : memref<4x21x128xbf16, #tpu.memory_space<vmem>>, vector<1x5x128xbf16>,
    %75 = arith.truncf %55 : vector<16x128xf32> to vector<16x128xbf16>
    %c2 = arith.constant 2 : index
    %c0_45 = arith.constant 0 : index
    %c0_46 = arith.constant 0 : index
    %76 = vector.load %arg10[%c2, %c0_45, %c0_46] : memref<4x21x128xbf16, #tpu.memory_space<vmem>>, vector<1x16x128xbf16>
    %77 = vector.shape_cast %76 : vector<1x16x128xbf16> to vector<16x128xbf16>
    %78 = vector.shape_cast %75 : vector<16x128xbf16> to vector<1x16x128xbf16>
    tpu.vector_store %arg10[%c2, %c0_45, %c0_46], %78 {strides = array<i32>} : memref<4x21x128xbf16, #tpu.memory_space<vmem>>, vector<1x16x128xbf16>,
    %cst_47 = arith.constant 0.000000e+00 : bf16
    %79 = vector.broadcast %cst_47 : bf16 to vector<5x128xbf16>
    %c2_48 = arith.constant 2 : index
    %c16_49 = arith.constant 16 : index
    %c0_50 = arith.constant 0 : index
    %80 = vector.load %arg10[%c2_48, %c16_49, %c0_50] : memref<4x21x128xbf16, #tpu.memory_space<vmem>>, vector<1x5x128xbf16>
    %81 = vector.shape_cast %80 : vector<1x5x128xbf16> to vector<5x128xbf16>
    %82 = vector.shape_cast %79 : vector<5x128xbf16> to vector<1x5x128xbf16>
    tpu.vector_store %arg10[%c2_48, %c16_49, %c0_50], %82 {strides = array<i32>} : memref<4x21x128xbf16, #tpu.memory_space<vmem>>, vector<1x5x128xbf16>,
    %83 = arith.truncf %58 : vector<16x128xf32> to vector<16x128xbf16>
    %c3 = arith.constant 3 : index
    %c0_51 = arith.constant 0 : index
    %c0_52 = arith.constant 0 : index
    %84 = vector.load %arg10[%c3, %c0_51, %c0_52] : memref<4x21x128xbf16, #tpu.memory_space<vmem>>, vector<1x16x128xbf16>
    %85 = vector.shape_cast %84 : vector<1x16x128xbf16> to vector<16x128xbf16>
    %86 = vector.shape_cast %83 : vector<16x128xbf16> to vector<1x16x128xbf16>
    tpu.vector_store %arg10[%c3, %c0_51, %c0_52], %86 {strides = array<i32>} : memref<4x21x128xbf16, #tpu.memory_space<vmem>>, vector<1x16x128xbf16>,
    %cst_53 = arith.constant 0.000000e+00 : bf16
    %87 = vector.broadcast %cst_53 : bf16 to vector<5x128xbf16>
    %c3_54 = arith.constant 3 : index
    %c16_55 = arith.constant 16 : index
    %c0_56 = arith.constant 0 : index
    %88 = vector.load %arg10[%c3_54, %c16_55, %c0_56] : memref<4x21x128xbf16, #tpu.memory_space<vmem>>, vector<1x5x128xbf16>
    %89 = vector.shape_cast %88 : vector<1x5x128xbf16> to vector<5x128xbf16>
    %90 = vector.shape_cast %87 : vector<5x128xbf16> to vector<1x5x128xbf16>
    tpu.vector_store %arg10[%c3_54, %c16_55, %c0_56], %90 {strides = array<i32>} : memref<4x21x128xbf16, #tpu.memory_space<vmem>>, vector<1x5x128xbf16>,
    %cst_57 = arith.constant 0.000000e+00 : f32
    %91 = vector.broadcast %cst_57 : f32 to vector<48x16xf32>
    %c0_58 = arith.constant 0 : index
    %c0_59 = arith.constant 0 : index
    %c0_60 = arith.constant 0 : index
    %92 = vector.load %arg10[%c0_58, %c0_59, %c0_60] : memref<4x21x128xbf16, #tpu.memory_space<vmem>>, vector<1x16x128xbf16>
    %93 = vector.shape_cast %92 : vector<1x16x128xbf16> to vector<16x128xbf16>
    %c0_61 = arith.constant 0 : index
    %c0_62 = arith.constant 0 : index
    %c0_63 = arith.constant 0 : index
    %94 = vector.load %arg7[%c0_61, %c0_62, %c0_63] : memref<9x48x128xbf16, #tpu.memory_space<vmem>>, vector<1x48x128xbf16>
    %95 = vector.shape_cast %94 : vector<1x48x128xbf16> to vector<48x128xbf16>
    %cst_64 = arith.constant dense<0.000000e+00> : vector<48x16xf32>
    %96 = tpu.matmul %95, %93, %cst_64 {dimension_numbers = #tpu.dot_dimension_numbers<[1], [1], [0], [0], [0, 0, 1, 0], [], []>} : vector<48x128xbf16>, vector<16x128xbf16>, vector<48x16xf32> -> vector<48x16xf32>
    %97 = arith.addf %91, %96 : vector<48x16xf32>
    %c1_65 = arith.constant 1 : index
    %c0_66 = arith.constant 0 : index
    %c0_67 = arith.constant 0 : index
    %98 = vector.load %arg10[%c1_65, %c0_66, %c0_67] : memref<4x21x128xbf16, #tpu.memory_space<vmem>>, vector<1x16x128xbf16>
    %99 = vector.shape_cast %98 : vector<1x16x128xbf16> to vector<16x128xbf16>
    %c1_68 = arith.constant 1 : index
    %c0_69 = arith.constant 0 : index
    %c0_70 = arith.constant 0 : index
    %100 = vector.load %arg7[%c1_68, %c0_69, %c0_70] : memref<9x48x128xbf16, #tpu.memory_space<vmem>>, vector<1x48x128xbf16>
    %101 = vector.shape_cast %100 : vector<1x48x128xbf16> to vector<48x128xbf16>
    %cst_71 = arith.constant dense<0.000000e+00> : vector<48x16xf32>
    %102 = tpu.matmul %101, %99, %cst_71 {dimension_numbers = #tpu.dot_dimension_numbers<[1], [1], [0], [0], [0, 0, 1, 0], [], []>} : vector<48x128xbf16>, vector<16x128xbf16>, vector<48x16xf32> -> vector<48x16xf32>
    %103 = arith.addf %97, %102 : vector<48x16xf32>
    %c0_72 = arith.constant 0 : index
    %c1_73 = arith.constant 1 : index
    %c0_74 = arith.constant 0 : index
    %104 = vector.load %arg10[%c0_72, %c1_73, %c0_74] : memref<4x21x128xbf16, #tpu.memory_space<vmem>>, vector<1x16x128xbf16>
    %105 = vector.shape_cast %104 : vector<1x16x128xbf16> to vector<16x128xbf16>
    %cst_75 = arith.constant 0.000000e+00 : bf16
    %106 = vector.broadcast %cst_75 : bf16 to vector<16x128xbf16>
    %107 = vector.shape_cast %18 : vector<16x1xi1> to vector<16x1xi1>
    %108 = vector.broadcast %107 : vector<16x1xi1> to vector<16x128xi1>
    %109 = arith.select %108, %105, %106 : vector<16x128xi1>, vector<16x128xbf16>
    %c2_76 = arith.constant 2 : index
    %c0_77 = arith.constant 0 : index
    %c0_78 = arith.constant 0 : index
    %110 = vector.load %arg7[%c2_76, %c0_77, %c0_78] : memref<9x48x128xbf16, #tpu.memory_space<vmem>>, vector<1x48x128xbf16>
    %111 = vector.shape_cast %110 : vector<1x48x128xbf16> to vector<48x128xbf16>
    %cst_79 = arith.constant dense<0.000000e+00> : vector<48x16xf32>
    %112 = tpu.matmul %111, %109, %cst_79 {dimension_numbers = #tpu.dot_dimension_numbers<[1], [1], [0], [0], [0, 0, 1, 0], [], []>} : vector<48x128xbf16>, vector<16x128xbf16>, vector<48x16xf32> -> vector<48x16xf32>
    %113 = arith.addf %103, %112 : vector<48x16xf32>
    %c2_80 = arith.constant 2 : index
    %c0_81 = arith.constant 0 : index
    %c0_82 = arith.constant 0 : index
    %114 = vector.load %arg10[%c2_80, %c0_81, %c0_82] : memref<4x21x128xbf16, #tpu.memory_space<vmem>>, vector<1x16x128xbf16>
    %115 = vector.shape_cast %114 : vector<1x16x128xbf16> to vector<16x128xbf16>
    %c3_83 = arith.constant 3 : index
    %c0_84 = arith.constant 0 : index
    %c0_85 = arith.constant 0 : index
    %116 = vector.load %arg7[%c3_83, %c0_84, %c0_85] : memref<9x48x128xbf16, #tpu.memory_space<vmem>>, vector<1x48x128xbf16>
    %117 = vector.shape_cast %116 : vector<1x48x128xbf16> to vector<48x128xbf16>
    %cst_86 = arith.constant dense<0.000000e+00> : vector<48x16xf32>
    %118 = tpu.matmul %117, %115, %cst_86 {dimension_numbers = #tpu.dot_dimension_numbers<[1], [1], [0], [0], [0, 0, 1, 0], [], []>} : vector<48x128xbf16>, vector<16x128xbf16>, vector<48x16xf32> -> vector<48x16xf32>
    %119 = arith.addf %113, %118 : vector<48x16xf32>
    %c3_87 = arith.constant 3 : index
    %c0_88 = arith.constant 0 : index
    %c0_89 = arith.constant 0 : index
    %120 = vector.load %arg10[%c3_87, %c0_88, %c0_89] : memref<4x21x128xbf16, #tpu.memory_space<vmem>>, vector<1x16x128xbf16>
    %121 = vector.shape_cast %120 : vector<1x16x128xbf16> to vector<16x128xbf16>
    %c4_90 = arith.constant 4 : index
    %c0_91 = arith.constant 0 : index
    %c0_92 = arith.constant 0 : index
    %122 = vector.load %arg7[%c4_90, %c0_91, %c0_92] : memref<9x48x128xbf16, #tpu.memory_space<vmem>>, vector<1x48x128xbf16>
    %123 = vector.shape_cast %122 : vector<1x48x128xbf16> to vector<48x128xbf16>
    %cst_93 = arith.constant dense<0.000000e+00> : vector<48x16xf32>
    %124 = tpu.matmul %123, %121, %cst_93 {dimension_numbers = #tpu.dot_dimension_numbers<[1], [1], [0], [0], [0, 0, 1, 0], [], []>} : vector<48x128xbf16>, vector<16x128xbf16>, vector<48x16xf32> -> vector<48x16xf32>
    %125 = arith.addf %119, %124 : vector<48x16xf32>
    %c2_94 = arith.constant 2 : index
    %c1_95 = arith.constant 1 : index
    %c0_96 = arith.constant 0 : index
    %126 = vector.load %arg10[%c2_94, %c1_95, %c0_96] : memref<4x21x128xbf16, #tpu.memory_space<vmem>>, vector<1x16x128xbf16>
    %127 = vector.shape_cast %126 : vector<1x16x128xbf16> to vector<16x128xbf16>
    %cst_97 = arith.constant 0.000000e+00 : bf16
    %128 = vector.broadcast %cst_97 : bf16 to vector<16x128xbf16>
    %129 = vector.shape_cast %18 : vector<16x1xi1> to vector<16x1xi1>
    %130 = vector.broadcast %129 : vector<16x1xi1> to vector<16x128xi1>
    %131 = arith.select %130, %127, %128 : vector<16x128xi1>, vector<16x128xbf16>
    %c5_98 = arith.constant 5 : index
    %c0_99 = arith.constant 0 : index
    %c0_100 = arith.constant 0 : index
    %132 = vector.load %arg7[%c5_98, %c0_99, %c0_100] : memref<9x48x128xbf16, #tpu.memory_space<vmem>>, vector<1x48x128xbf16>
    %133 = vector.shape_cast %132 : vector<1x48x128xbf16> to vector<48x128xbf16>
    %cst_101 = arith.constant dense<0.000000e+00> : vector<48x16xf32>
    %134 = tpu.matmul %133, %131, %cst_101 {dimension_numbers = #tpu.dot_dimension_numbers<[1], [1], [0], [0], [0, 0, 1, 0], [], []>} : vector<48x128xbf16>, vector<16x128xbf16>, vector<48x16xf32> -> vector<48x16xf32>
    %135 = arith.addf %125, %134 : vector<48x16xf32>
    %c0_102 = arith.constant 0 : index
    %c4_103 = arith.constant 4 : index
    %c0_104 = arith.constant 0 : index
    %136 = vector.load %arg10[%c0_102, %c4_103, %c0_104] : memref<4x21x128xbf16, #tpu.memory_space<vmem>>, vector<1x16x128xbf16>
    %137 = vector.shape_cast %136 : vector<1x16x128xbf16> to vector<16x128xbf16>
    %c6 = arith.constant 6 : index
    %c0_105 = arith.constant 0 : index
    %c0_106 = arith.constant 0 : index
    %138 = vector.load %arg7[%c6, %c0_105, %c0_106] : memref<9x48x128xbf16, #tpu.memory_space<vmem>>, vector<1x48x128xbf16>
    %139 = vector.shape_cast %138 : vector<1x48x128xbf16> to vector<48x128xbf16>
    %cst_107 = arith.constant dense<0.000000e+00> : vector<48x16xf32>
    %140 = tpu.matmul %139, %137, %cst_107 {dimension_numbers = #tpu.dot_dimension_numbers<[1], [1], [0], [0], [0, 0, 1, 0], [], []>} : vector<48x128xbf16>, vector<16x128xbf16>, vector<48x16xf32> -> vector<48x16xf32>
    %141 = arith.addf %135, %140 : vector<48x16xf32>
    %c1_108 = arith.constant 1 : index
    %c4_109 = arith.constant 4 : index
    %c0_110 = arith.constant 0 : index
    %142 = vector.load %arg10[%c1_108, %c4_109, %c0_110] : memref<4x21x128xbf16, #tpu.memory_space<vmem>>, vector<1x16x128xbf16>
    %143 = vector.shape_cast %142 : vector<1x16x128xbf16> to vector<16x128xbf16>
    %c7 = arith.constant 7 : index
    %c0_111 = arith.constant 0 : index
    %c0_112 = arith.constant 0 : index
    %144 = vector.load %arg7[%c7, %c0_111, %c0_112] : memref<9x48x128xbf16, #tpu.memory_space<vmem>>, vector<1x48x128xbf16>
    %145 = vector.shape_cast %144 : vector<1x48x128xbf16> to vector<48x128xbf16>
    %cst_113 = arith.constant dense<0.000000e+00> : vector<48x16xf32>
    %146 = tpu.matmul %145, %143, %cst_113 {dimension_numbers = #tpu.dot_dimension_numbers<[1], [1], [0], [0], [0, 0, 1, 0], [], []>} : vector<48x128xbf16>, vector<16x128xbf16>, vector<48x16xf32> -> vector<48x16xf32>
    %147 = arith.addf %141, %146 : vector<48x16xf32>
    %c0_114 = arith.constant 0 : index
    %c5_115 = arith.constant 5 : index
    %c0_116 = arith.constant 0 : index
    %148 = vector.load %arg10[%c0_114, %c5_115, %c0_116] : memref<4x21x128xbf16, #tpu.memory_space<vmem>>, vector<1x16x128xbf16>
    %149 = vector.shape_cast %148 : vector<1x16x128xbf16> to vector<16x128xbf16>
    %cst_117 = arith.constant 0.000000e+00 : bf16
    %150 = vector.broadcast %cst_117 : bf16 to vector<16x128xbf16>
    %151 = vector.shape_cast %18 : vector<16x1xi1> to vector<16x1xi1>
    %152 = vector.broadcast %151 : vector<16x1xi1> to vector<16x128xi1>
    %153 = arith.select %152, %149, %150 : vector<16x128xi1>, vector<16x128xbf16>
    %c8 = arith.constant 8 : index
    %c0_118 = arith.constant 0 : index
    %c0_119 = arith.constant 0 : index
    %154 = vector.load %arg7[%c8, %c0_118, %c0_119] : memref<9x48x128xbf16, #tpu.memory_space<vmem>>, vector<1x48x128xbf16>
    %155 = vector.shape_cast %154 : vector<1x48x128xbf16> to vector<48x128xbf16>
    %cst_120 = arith.constant dense<0.000000e+00> : vector<48x16xf32>
    %156 = tpu.matmul %155, %153, %cst_120 {dimension_numbers = #tpu.dot_dimension_numbers<[1], [1], [0], [0], [0, 0, 1, 0], [], []>} : vector<48x128xbf16>, vector<16x128xbf16>, vector<48x16xf32> -> vector<48x16xf32>
    %157 = arith.addf %147, %156 : vector<48x16xf32>
    %cst_121 = arith.constant 0.000000e+00 : f32
    %158 = vector.broadcast %cst_121 : f32 to vector<48x16xf32>
    %159 = arith.subf %158, %157 : vector<48x16xf32>
    %160 = math.exp %159 : vector<48x16xf32>
    %cst_122 = arith.constant 1.000000e+00 : f32
    %161 = vector.broadcast %cst_122 : f32 to vector<48x16xf32>
    %162 = arith.addf %161, %160 : vector<48x16xf32>
    %163 = tpu.reciprocal %162 {approx = true} : vector<48x16xf32> -> vector<48x16xf32>
    %c0_123 = arith.constant 0 : index
    %c0_124 = arith.constant 0 : index
    %c0_125 = arith.constant 0 : index
    %164 = vector.load %arg8[%c0_123, %c0_124, %c0_125] : memref<1x48x16xf32, #tpu.memory_space<vmem>>, vector<1x48x16xf32>
    %165 = vector.shape_cast %164 : vector<1x48x16xf32> to vector<48x16xf32>
    %166 = vector.shape_cast %163 : vector<48x16xf32> to vector<1x48x16xf32>
    tpu.vector_store %arg8[%c0_123, %c0_124, %c0_125], %166 {strides = array<i32>} : memref<1x48x16xf32, #tpu.memory_space<vmem>>, vector<1x48x16xf32>,
    return
  }
  func.func @transform_0(%arg0: i32) -> (i32, i32, i32) {
    %c0_i32 = arith.constant 0 : i32
    %c0_i32_0 = arith.constant 0 : i32
    %c0_i32_1 = arith.constant 0 : i32
    return %arg0, %c0_i32, %c0_i32_0 : i32, i32, i32
  }
  func.func @transform_1(%arg0: i32) -> (i32, i32) {
    %c0_i32 = arith.constant 0 : i32
    %c0_i32_0 = arith.constant 0 : i32
    %c0_i32_1 = arith.constant 0 : i32
    return %c0_i32, %c0_i32_0 : i32, i32
  }
  func.func @transform_2(%arg0: i32) -> (i32, i32) {
    %c0_i32 = arith.constant 0 : i32
    %c0_i32_0 = arith.constant 0 : i32
    %c0_i32_1 = arith.constant 0 : i32
    return %c0_i32, %c0_i32_0 : i32, i32
  }
  func.func @transform_3(%arg0: i32) -> (i32, i32) {
    %c0_i32 = arith.constant 0 : i32
    %c0_i32_0 = arith.constant 0 : i32
    %c0_i32_1 = arith.constant 0 : i32
    return %c0_i32, %c0_i32_0 : i32, i32
  }
  func.func @transform_4(%arg0: i32) -> (i32, i32) {
    %c0_i32 = arith.constant 0 : i32
    %c0_i32_0 = arith.constant 0 : i32
    %c0_i32_1 = arith.constant 0 : i32
    return %c0_i32, %c0_i32_0 : i32, i32
  }
  func.func @transform_5(%arg0: i32) -> (i32, i32) {
    %c0_i32 = arith.constant 0 : i32
    %c0_i32_0 = arith.constant 0 : i32
    %c0_i32_1 = arith.constant 0 : i32
    return %c0_i32, %c0_i32_0 : i32, i32
  }
  func.func @transform_6(%arg0: i32) -> (i32, i32, i32) {
    %c0_i32 = arith.constant 0 : i32
    %c0_i32_0 = arith.constant 0 : i32
    %c0_i32_1 = arith.constant 0 : i32
    %c0_i32_2 = arith.constant 0 : i32
    return %c0_i32, %c0_i32_0, %c0_i32_1 : i32, i32, i32
  }
  func.func @transform_7(%arg0: i32) -> (i32, i32, i32) {
    %c0_i32 = arith.constant 0 : i32
    %c0_i32_0 = arith.constant 0 : i32
    %c0_i32_1 = arith.constant 0 : i32
    return %arg0, %c0_i32, %c0_i32_0 : i32, i32, i32
  }
}

</mosaic_0001>

<llo_original>
// kernel: denoiser_forward.1
$region0: #{denoiser_forward.1}
  #allocation0 [shape = 'u32[]', space=smem, size = 0x4, offset = 0x4, fixed_abs, tag = 'smem constant byte address 0x4 - core index']
  #allocation1 [shape = 'u32[144,128]{1,0:T(1,128)}', space=vmem, size = 0x12000, scoped, tag = 'internal scratch']
  #allocation2 [shape = 'bf16[21,64]{1,0:T(8,128)(2,1)}', space=vmem, size = 0x1800, scoped, tag = 'scratch operand']
  #allocation3 [shape = 'bf16[4,21,128]{2,1,0:T(8,128)(2,1)}', space=vmem, size = 0x6000, scoped, tag = 'scratch operand']
  %s0 = inlined_call_operand.vmem [shape: bf16[2,64,27], index: 0, kind: input, shape index: {}]
  %s1 = inlined_call_operand.vmem [shape: bf16[27,64], index: 1, kind: input, shape index: {}]
  %s2 = inlined_call_operand.vmem [shape: bf16[64,128], index: 2, kind: input, shape index: {}]
  %s3 = inlined_call_operand.vmem [shape: bf16[128,128], index: 3, kind: input, shape index: {}]
  %s4 = inlined_call_operand.vmem [shape: bf16[128,128], index: 4, kind: input, shape index: {}]
  %s5 = inlined_call_operand.vmem [shape: bf16[256,128], index: 5, kind: input, shape index: {}]
  %s6 = inlined_call_operand.vmem [shape: bf16[9,48,128], index: 6, kind: input, shape index: {}]
  %s7 = inlined_call_operand.vmem [shape: f32[2,48,16], index: 7, kind: output, shape index: {}]
  %s8 = sld [smem:[#allocation0]]
  $region61: #{denoiser_forward.1} parent=0
    _
  %s10 = ssub.s32 1, %s8
  %s11 = scalar_select 0, %s10, %s8
  loop: start=0, step=1, limit=4
  $region2: #{denoiser_forward.1} parent=0 // loop_pre_header
    _
  $region3: #{denoiser_forward.1} parent=0 // loop_header
    %s13 = sphi 0, %s17
    %p14 = scmp.ge.s32.totalorder %s13, 4
    %s23 = sphi 0, %s25
    %s26 = sphi 0, %s23
    %s27 = sphi 0, %s26
    %s43 = sphi 0, %s27
    %s47 = sphi 0, %s47
    %s49 = sphi 0, %s47
    %s50 = sphi 0, %s49
    %s64 = sphi 0, %s50
    %s68 = sphi 0, %s68
    %s70 = sphi 0, %s68
    %s71 = sphi 0, %s70
    %s85 = sphi 0, %s71
    %s89 = sphi 0, %s89
    %s91 = sphi 0, %s89
    %s92 = sphi 0, %s91
    %s106 = sphi 0, %s92
    %s110 = sphi 0, %s110
    %s112 = sphi 0, %s110
    %s113 = sphi 0, %s112
    %s127 = sphi 0, %s113
    %s131 = sphi 0, %s131
    %s133 = sphi 0, %s131
    %s134 = sphi 0, %s133
    %s148 = sphi 0, %s134
    %s152 = sphi 0, %s152
    %s154 = sphi 0, %s152
    %s155 = sphi 0, %s154
    %s169 = sphi 0, %s155
    %s175 = sphi 0, %s177
    %s178 = sphi 0, %s175
    %s179 = sphi 0, %s178
    %s195 = sphi 0, %s179
  $region4: #{denoiser_forward.1} parent=0 // loop_header_branch
    %16 = sbr.rel (%p14) target = $region8
  $region5: #{denoiser_forward.1} parent=0 // loop_body
    %s18 = ssub.s32 %s13, 1
    %s19 = ssub.s32 %s13, 2
    %s20 = sadd.s32 %s13, 1
    %s21 = ssub.s32 %s13, %s20
    %p22 = scmp.eq.s32.totalorder %s21, 0
    %s24 = sadd.s32 %s23, 1
    %s25 = scalar_select %p22, %s23, %s24
    %p28 = pneg %p22
    %p29 = scmp.eq.s32.totalorder %s13, 1
    %p30 = por %p28, %p29
    %p31 = scmp.ne.s32.totalorder %s23, %s26
    %p32 = scmp.eq.s32.totalorder %s13, 0
    %p33 = por %p31, %p32
    %p34 = scmp.ne.s32.totalorder %s23, %s26
    %p35 = scmp.eq.s32.totalorder %s18, 1
    %p36 = por %p34, %p35
    %p37 = scmp.ne.s32.totalorder %s26, %s27
    %p38 = scmp.eq.s32.totalorder %s18, 0
    %p39 = por %p37, %p38
    %p40 = scmp.ne.s32.totalorder %s26, %s27
    %p41 = scmp.eq.s32.totalorder %s19, 1
    %p42 = por %p40, %p41
    %p44 = scmp.ne.s32.totalorder %s27, %s43
    %p45 = scmp.eq.s32.totalorder %s19, 0
    %p46 = por %p44, %p45
    %s48 = sadd.s32 %s47, 1
    %p51 = scmp.eq.s32.totalorder %s13, 1
    %p52 = scmp.ne.s32.totalorder %s47, %s49
    %p53 = scmp.eq.s32.totalorder %s13, 0
    %p54 = por %p52, %p53
    %p55 = scmp.ne.s32.totalorder %s47, %s49
    %p56 = scmp.eq.s32.totalorder %s18, 1
    %p57 = por %p55, %p56
    %p58 = scmp.ne.s32.totalorder %s49, %s50
    %p59 = scmp.eq.s32.totalorder %s18, 0
    %p60 = por %p58, %p59
    %p61 = scmp.ne.s32.totalorder %s49, %s50
    %p62 = scmp.eq.s32.totalorder %s19, 1
    %p63 = por %p61, %p62
    %p65 = scmp.ne.s32.totalorder %s50, %s64
    %p66 = scmp.eq.s32.totalorder %s19, 0
    %p67 = por %p65, %p66
    %s69 = sadd.s32 %s68, 1
    %p72 = scmp.eq.s32.totalorder %s13, 1
    %p73 = scmp.ne.s32.totalorder %s68, %s70
    %p74 = scmp.eq.s32.totalorder %s13, 0
    %p75 = por %p73, %p74
    %p76 = scmp.ne.s32.totalorder %s68, %s70
    %p77 = scmp.eq.s32.totalorder %s18, 1
    %p78 = por %p76, %p77
    %p79 = scmp.ne.s32.totalorder %s70, %s71
    %p80 = scmp.eq.s32.totalorder %s18, 0
    %p81 = por %p79, %p80
    %p82 = scmp.ne.s32.totalorder %s70, %s71
    %p83 = scmp.eq.s32.totalorder %s19, 1
    %p84 = por %p82, %p83
    %p86 = scmp.ne.s32.totalorder %s71, %s85
    %p87 = scmp.eq.s32.totalorder %s19, 0
    %p88 = por %p86, %p87
    %s90 = sadd.s32 %s89, 1
    %p93 = scmp.eq.s32.totalorder %s13, 1
    %p94 = scmp.ne.s32.totalorder %s89, %s91
    %p95 = scmp.eq.s32.totalorder %s13, 0
    %p96 = por %p94, %p95
    %p97 = scmp.ne.s32.totalorder %s89, %s91
    %p98 = scmp.eq.s32.totalorder %s18, 1
    %p99 = por %p97, %p98
    %p100 = scmp.ne.s32.totalorder %s91, %s92
    %p101 = scmp.eq.s32.totalorder %s18, 0
    %p102 = por %p100, %p101
    %p103 = scmp.ne.s32.totalorder %s91, %s92
    %p104 = scmp.eq.s32.totalorder %s19, 1
    %p105 = por %p103, %p104
    %p107 = scmp.ne.s32.totalorder %s92, %s106
    %p108 = scmp.eq.s32.totalorder %s19, 0
    %p109 = por %p107, %p108
    %s111 = sadd.s32 %s110, 1
    %p114 = scmp.eq.s32.totalorder %s13, 1
    %p115 = scmp.ne.s32.totalorder %s110, %s112
    %p116 = scmp.eq.s32.totalorder %s13, 0
    %p117 = por %p115, %p116
    %p118 = scmp.ne.s32.totalorder %s110, %s112
    %p119 = scmp.eq.s32.totalorder %s18, 1
    %p120 = por %p118, %p119
    %p121 = scmp.ne.s32.totalorder %s112, %s113
    %p122 = scmp.eq.s32.totalorder %s18, 0
    %p123 = por %p121, %p122
    %p124 = scmp.ne.s32.totalorder %s112, %s113
    %p125 = scmp.eq.s32.totalorder %s19, 1
    %p126 = por %p124, %p125
    %p128 = scmp.ne.s32.totalorder %s113, %s127
    %p129 = scmp.eq.s32.totalorder %s19, 0
    %p130 = por %p128, %p129
    %s132 = sadd.s32 %s131, 1
    %p135 = scmp.eq.s32.totalorder %s13, 1
    %p136 = scmp.ne.s32.totalorder %s131, %s133
    %p137 = scmp.eq.s32.totalorder %s13, 0
    %p138 = por %p136, %p137
    %p139 = scmp.ne.s32.totalorder %s131, %s133
    %p140 = scmp.eq.s32.totalorder %s18, 1
    %p141 = por %p139, %p140
    %p142 = scmp.ne.s32.totalorder %s133, %s134
    %p143 = scmp.eq.s32.totalorder %s18, 0
    %p144 = por %p142, %p143
    %p145 = scmp.ne.s32.totalorder %s133, %s134
    %p146 = scmp.eq.s32.totalorder %s19, 1
    %p147 = por %p145, %p146
    %p149 = scmp.ne.s32.totalorder %s134, %s148
    %p150 = scmp.eq.s32.totalorder %s19, 0
    %p151 = por %p149, %p150
    %s153 = sadd.s32 %s152, 1
    %p156 = scmp.eq.s32.totalorder %s13, 1
    %p157 = scmp.ne.s32.totalorder %s152, %s154
    %p158 = scmp.eq.s32.totalorder %s13, 0
    %p159 = por %p157, %p158
    %p160 = scmp.ne.s32.totalorder %s152, %s154
    %p161 = scmp.eq.s32.totalorder %s18, 1
    %p162 = por %p160, %p161
    %p163 = scmp.ne.s32.totalorder %s154, %s155
    %p164 = scmp.eq.s32.totalorder %s18, 0
    %p165 = por %p163, %p164
    %p166 = scmp.ne.s32.totalorder %s154, %s155
    %p167 = scmp.eq.s32.totalorder %s19, 1
    %p168 = por %p166, %p167
    %p170 = scmp.ne.s32.totalorder %s155, %s169
    %p171 = scmp.eq.s32.totalorder %s19, 0
    %p172 = por %p170, %p171
    %s173 = ssub.s32 %s13, %s20
    %p174 = scmp.eq.s32.totalorder %s173, 0
    %s176 = sadd.s32 %s175, 1
    %s177 = scalar_select %p174, %s175, %s176
    %p180 = pneg %p174
    %p181 = scmp.eq.s32.totalorder %s13, 1
    %p182 = por %p180, %p181
    %p183 = scmp.ne.s32.totalorder %s175, %s178
    %p184 = scmp.eq.s32.totalorder %s13, 0
    %p185 = por %p183, %p184
    %p186 = scmp.ne.s32.totalorder %s175, %s178
    %p187 = scmp.eq.s32.totalorder %s18, 1
    %p188 = por %p186, %p187
    %p189 = scmp.ne.s32.totalorder %s178, %s179
    %p190 = scmp.eq.s32.totalorder %s18, 0
    %p191 = por %p189, %p190
    %p192 = scmp.ne.s32.totalorder %s178, %s179
    %p193 = scmp.eq.s32.totalorder %s19, 1
    %p194 = por %p192, %p193
    %p196 = scmp.ne.s32.totalorder %s179, %s195
    %p197 = scmp.eq.s32.totalorder %s19, 0
    %p198 = por %p196, %p197
    %p199 = scmp.le.s32.totalorder 1, %s13
    %p200 = scmp.lt.s32.totalorder %s13, 3
    %p201 = pnand %p199, %p200
    %p202 = pneg %p201
    // Predicated region
    $region9: #{denoiser_forward.1} parent=5 // pred_check
      _
    $region10: #{denoiser_forward.1} parent=5 // pred_check_branch
      %204 = sbr.rel (%p201) target = $region12
    $region11: #{denoiser_forward.1} parent=5 // pred_region
      %s205 = ssub.s32 %s13, 1
      // Predicated region
      $region13: #{denoiser_forward.1} parent=11 // pred_check
        %p206 = pneg %p60
      $region14: #{denoiser_forward.1} parent=11 // pred_check_branch
        %208 = sbr.rel (%p206) target = $region16
      $region15: #{denoiser_forward.1} parent=11 // pred_region
        _
      $region16: #{denoiser_forward.1} parent=11 // pred_fallthru
        _
      // Predicated region
      $region17: #{denoiser_forward.1} parent=11 // pred_check
        %p209 = pneg %p81
      $region18: #{denoiser_forward.1} parent=11 // pred_check_branch
        %211 = sbr.rel (%p209) target = $region20
      $region19: #{denoiser_forward.1} parent=11 // pred_region
        _
      $region20: #{denoiser_forward.1} parent=11 // pred_fallthru
        _
      // Predicated region
      $region21: #{denoiser_forward.1} parent=11 // pred_check
        %p212 = pneg %p102
      $region22: #{denoiser_forward.1} parent=11 // pred_check_branch
        %214 = sbr.rel (%p212) target = $region24
      $region23: #{denoiser_forward.1} parent=11 // pred_region
        _
      $region24: #{denoiser_forward.1} parent=11 // pred_fallthru
        _
      // Predicated region
      $region25: #{denoiser_forward.1} parent=11 // pred_check
        %p215 = pneg %p123
      $region26: #{denoiser_forward.1} parent=11 // pred_check_branch
        %217 = sbr.rel (%p215) target = $region28
      $region27: #{denoiser_forward.1} parent=11 // pred_region
        _
      $region28: #{denoiser_forward.1} parent=11 // pred_fallthru
        _
      // Predicated region
      $region29: #{denoiser_forward.1} parent=11 // pred_check
        %p218 = pneg %p144
      $region30: #{denoiser_forward.1} parent=11 // pred_check_branch
        %220 = sbr.rel (%p218) target = $region32
      $region31: #{denoiser_forward.1} parent=11 // pred_region
        _
      $region32: #{denoiser_forward.1} parent=11 // pred_fallthru
        _
      // Predicated region
      $region33: #{denoiser_forward.1} parent=11 // pred_check
        %p221 = pneg %p165
      $region34: #{denoiser_forward.1} parent=11 // pred_check_branch
        %223 = sbr.rel (%p221) target = $region36
      $region35: #{denoiser_forward.1} parent=11 // pred_region
        _
      $region36: #{denoiser_forward.1} parent=11 // pred_fallthru
        _
    $region12: #{denoiser_forward.1} parent=5 // pred_fallthru
      _
    %p224 = scmp.lt.s32.totalorder %s13, 2
    // Predicated region
    $region37: #{denoiser_forward.1} parent=5 // pred_check
      %p225 = pneg %p224
    $region38: #{denoiser_forward.1} parent=5 // pred_check_branch
      %227 = sbr.rel (%p225) target = $region40
    $region39: #{denoiser_forward.1} parent=5 // pred_region
      // Predicated region
      $region41: #{denoiser_forward.1} parent=39 // pred_check
        %p228 = pneg %p33
      $region42: #{denoiser_forward.1} parent=39 // pred_check_branch
        %230 = sbr.rel (%p228) target = $region44
      $region43: #{denoiser_forward.1} parent=39 // pred_region
        %p231 = scmp.lt.s32.totalorder %s13, 1
        %s232 = scalar_select %p231, %s13, 1
        %s233 = smul.addr %s232, 8
        %s234 = smul.addr %s233, 4
        %s235 = scalar_lea.vmem %s0, %s234
      $region44: #{denoiser_forward.1} parent=39 // pred_fallthru
        _
    $region40: #{denoiser_forward.1} parent=5 // pred_fallthru
      _
    %p236 = scmp.le.s32.totalorder 1, %s13
    %p237 = scmp.lt.s32.totalorder %s13, 3
    %p238 = pnand %p236, %p237
    %p239 = pneg %p238
    // Predicated region
    $region45: #{denoiser_forward.1} parent=5 // pred_check
      _
    $region46: #{denoiser_forward.1} parent=5 // pred_check_branch
      %241 = sbr.rel (%p238) target = $region48
    $region47: #{denoiser_forward.1} parent=5 // pred_region
      %s242 = ssub.s32 %s13, 1
      %p243 = scmp.lt.s32.totalorder %s18, 1
      %s244 = scalar_select %p243, %s18, 1
      %s245 = smul.addr %s244, 8
      %s246 = smul.addr %s245, 4
      %s247 = scalar_lea.vmem %s0, %s246
      %p248 = pneg %p39
      %p249 = pneg %p36
      %p250 = pneg %p60
      %p251 = pneg %p57
      %p252 = pneg %p81
      %p253 = pneg %p78
      %p254 = pneg %p102
      %p255 = pneg %p99
      %p256 = pneg %p123
      %p257 = pneg %p120
      %p258 = pneg %p144
      %p259 = pneg %p141
      %p260 = pneg %p165
      %p261 = pneg %p162
      %p262 = pneg %p191
      %p263 = pneg %p188
      %p264 = scmp.lt.s32.totalorder %s18, 1
      %s265 = scalar_select %p264, %s18, 1
      %s266 = smul.addr %s265, 6
      %s267 = smul.addr %s266, 8
      %s268 = scalar_lea.vmem %s7, %s267
      %p269 = scmp.lt.s32.totalorder %s18, 1
      %s270 = scalar_select %p269, %s18, 1
      %s271 = smul.addr %s270, 8
      %s272 = smul.addr %s271, 4
      %s273 = scalar_lea.vmem %s0, %s272
      %p274 = scmp.lt.s32.totalorder %s18, 1
      %s275 = scalar_select %p274, %s18, 1
      %s276 = smul.addr %s275, 6
      %s277 = smul.addr %s276, 8
      %s278 = scalar_lea.vmem %s7, %s277
      %v282 = vlaneseq
      %v283 = vshrl.u32 %v282, 7
      %v284 = vadd.s32 %v283, 8
      %vm285 = vcmp.lt.s32.totalorder %v283, 0
      %v286 = vsub.s32 0, %v283
      %v287 = vsel %vm285, %v286, %v283
      %v288 = vshrl.u32 %v287, 2
      %v289 = vand.u32 %v287, 3
      %v290 = vsub.s32 0, %v289
      %v291 = vsel %vm285, %v290, %v289
      %vm292 = vcmp.lt.s32.totalorder %v284, 0
      %v293 = vsub.s32 0, %v284
      %v294 = vsel %vm292, %v293, %v284
      %v295 = vshrl.u32 %v294, 2
      %v296 = vand.u32 %v294, 3
      %v297 = vsub.s32 0, %v296
      %v298 = vsel %vm292, %v297, %v296
      %vm299 = vcmp.ne.s32.totalorder %v291, 0
      %vm300 = vcmp.ne.s32.totalorder %v298, 0
      %vm301 = vcmp.lt.s32.totalorder %v291, 0
      %vm302 = vcmp.lt.s32.totalorder %v298, 0
      %vm303 = vmand %vm301, %vm299
      %vm304 = vmand %vm302, %vm300
      %v305 = vadd.s32 %v291, 4
      %v306 = vadd.s32 %v298, 4
      %v307 = vsel %vm303, %v305, %v291
      %v308 = vsel %vm304, %v306, %v298
      %vm309 = vcmp.ne.s32.totalorder %v307, 3
      %vm310 = vcmp.ne.s32.totalorder %v308, 3
      %v311 = vld [vmem:[%s273] sm:$0xf]
      %v312 = vld [vmem:[%s273 + $0x4] sm:$0xf]
      %v313 = vld [vmem:[%s273 + $0x8] sm:$0xf]
      %v314 = vld [vmem:[%s273 + $0xc] sm:$0xf]
      %v315 = vld [vmem:[%s273 + $0x10] sm:$0xf]
      %v316 = vld [vmem:[%s273 + $0x14] sm:$0xf]
      %v317 = vld [vmem:[%s273 + $0x18] sm:$0xf]
      %v318 = vld [vmem:[%s273 + $0x1c] sm:$0xf]
      %v319 = vld [vmem:[%s1] sm:$0xf]
      %v320 = vld [vmem:[%s1 + $0x4] sm:$0xf]
      %v321 = vld [vmem:[%s1 + $0x8] sm:$0xf]
      %v322 = vld [vmem:[%s1 + $0xc] sm:$0x3]
      %v331 = vunpack.c.l.b16 %v311
      %v332 = vunpack.c.l.b16 %v312
      %v333 = vunpack.c.l.b16 %v313
      %v334 = vunpack.c.l.b16 %v314
      %v335 = vunpack.c.l.b16 %v315
      %v336 = vunpack.c.l.b16 %v316
      %v337 = vunpack.c.l.b16 %v317
      %v338 = vunpack.c.l.b16 %v318
      %v339 = vpack.c.b16 %v332, %v331
      %v340 = vpack.c.b16 %v334, %v333
      %v341 = vpack.c.b16 %v336, %v335
      %v342 = vpack.c.b16 %v338, %v337
      %v347 = vunpack.c.l.b16 %v319
      %v348 = vunpack.c.l.b16 %v320
      %v349 = vunpack.c.l.b16 %v321
      %v350 = vunpack.c.l.b16 %v322
      %v351 = vpack.c.b16 %v348, %v347
      %v352 = vpack.c.b16 %v350, %v349
      %vm354 = vcmask 220160
      %v356 = vsel %vm354, %v339, 0
      %v359 = vsel %vm354, %v340, 0
      %v362 = vsel %vm354, %v341, 0
      %v365 = vsel %vm354, %v342, 0
      %vm367 = vcmask 1044480
      %vm368 = vcmask 1045504
      %v369 = vsel %vm367, 4294967295, 65535
      %v370 = vsel %vm368, %v369, 0
      %v372 = vand.u32 %v352, %v370
      %374 = vmatprep.subr.bf16.mxu0 0
      %375 = vmatpush1.bf16.msra.mxu0 0
      %376 = vmatprep.subr.bf16.mxu0 0
      %377 = vmatpush1.bf16.msra.mxu0 0
      %378 = vmatprep.subr.bf16.mxu0 0
      %379 = vmatpush1.bf16.msra.mxu0 0
      %380 = vmatprep.subr.bf16.mxu0 0
      %381 = vmatpush1.bf16.msra.mxu0 0
      %382 = vmatprep.subr.bf16.mxu0 0
      %383 = vmatpush1.bf16.msra.mxu0 0
      %384 = vmatprep.subr.bf16.mxu0 0
      %385 = vmatpush1.bf16.msra.mxu0 0
      %386 = vmatprep.subr.bf16.mxu0 0
      %387 = vmatpush1.bf16.msra.mxu0 %v372
      %388 = vmatprep.subr.bf16.mxu0 0
      %389 = vmatpush1.bf16.msra.mxu0 %v351
      %390 = vmatprep.subr.bf16.mxu0 0
      %391 = vmatpush2.bf16.msra.mxu0 0
      %392 = vmatprep.subr.bf16.mxu0 0
      %393 = vmatpush2.bf16.msra.mxu0 0
      %394 = vmatprep.subr.bf16.mxu0 0
      %395 = vmatpush2.bf16.msra.mxu0 0
      %396 = vmatprep.subr.bf16.mxu0 0
      %397 = vmatpush2.bf16.msra.mxu0 0
      %398 = vmatprep.subr.bf16.mxu0 0
      %399 = vmatpush2.bf16.msra.mxu0 0
      %400 = vmatprep.subr.bf16.mxu0 0
      %401 = vmatpush2.bf16.msra.mxu0 0
      %402 = vmatprep.subr.bf16.mxu0 0
      %403 = vmatpush2.bf16.msra.mxu0 0
      %404 = vmatprep.subr.bf16.mxu0 0
      %405 = vmatpush2.bf16.msra.mxu0 0
      %406 = vmatprep.mubr.bf16.mxu0 0
      %407 = vmatmul.mubr.bf16.gmra.mxu0 %v356
      %v408 = vpop.f32.mrf.mxu0
      %v409 = vadd.f32 0.0, %v408
      %v410 = vpop.f32.mrf.mxu0
      %v411 = vpop.f32.mrf.mxu0
      %v412 = vadd.f32 0.0, %v411
      %v413 = vpop.f32.mrf.mxu0
      %414 = vmatprep.mubr.bf16.mxu0 0
      %415 = vmatmul.mubr.bf16.gmra.mxu0 %v359
      %v416 = vpop.f32.mrf.mxu0
      %v417 = vadd.f32 0.0, %v416
      %v418 = vpop.f32.mrf.mxu0
      %v419 = vpop.f32.mrf.mxu0
      %v420 = vadd.f32 0.0, %v419
      %v421 = vpop.f32.mrf.mxu0
      %422 = vmatprep.mubr.bf16.mxu0 0
      %423 = vmatmul.mubr.bf16.gmra.mxu0 %v362
      %v424 = vpop.f32.mrf.mxu0
      %v425 = vadd.f32 0.0, %v424
      %v426 = vpop.f32.mrf.mxu0
      %v427 = vpop.f32.mrf.mxu0
      %v428 = vadd.f32 0.0, %v427
      %v429 = vpop.f32.mrf.mxu0
      %430 = vmatprep.mubr.bf16.mxu0 0
      %431 = vmatmul.mubr.bf16.gmra.mxu0 %v365
      %v432 = vpop.f32.mrf.mxu0
      %v433 = vadd.f32 0.0, %v432
      %v434 = vpop.f32.mrf.mxu0
      %v435 = vpop.f32.mrf.mxu0
      %v436 = vadd.f32 0.0, %v435
      %v437 = vpop.f32.mrf.mxu0
      %438 = vdwg.mxu0
      %v439 = vmax.f32 %v409, 0.0
      %v440 = vmax.f32 %v412, 0.0
      %v441 = vmax.f32 %v417, 0.0
      %v442 = vmax.f32 %v420, 0.0
      %v443 = vmax.f32 %v425, 0.0
      %v444 = vmax.f32 %v428, 0.0
      %v445 = vmax.f32 %v433, 0.0
      %v446 = vmax.f32 %v436, 0.0
      %v447 = vmax.f32 %v439, %v441
      %v448 = vmax.f32 %v440, %v442
      %v449 = vmax.f32 %v443, %v445
      %v450 = vmax.f32 %v444, %v446
      %v451 = vmax.f32 %v447, %v449
      %v452 = vmax.f32 %v448, %v450
      %v453 = vpack.c.bf16 %v452, %v451
      %v455 = vunpack.c.l.b16 %v453
      %v456 = vunpack.c.h.b16 %v453
      %v457 = vpack.c.b16 %v455, %v455
      %v458 = vpack.c.b16 %v456, %v456
      %vm461 = vcmask 519168
      %462 = vst.msk [vmem:[#allocation2] sm:$0xf] %vm461, %v457
      %463 = vst.msk [vmem:[#allocation2 + $0x4] sm:$0xf] %vm461, %v458
      %vm464 = vcmask 518144
      %vm465 = vsmask.f32 2304
      %vm466 = vmand %vm464, %vm465
      %v467 = vld [vmem:[#allocation2 + $0x8] sm:$0x7]
      %v468 = vsel %vm466, 0, %v467
      %469 = vst [vmem:[#allocation2 + $0x8] sm:$0x7] %v468
      %v470 = vld [vmem:[#allocation2] sm:$0xf]
      %v471 = vld [vmem:[#allocation2 + $0x4] sm:$0xf]
      %v472 = vld [vmem:[#allocation2 + $0x8] sm:$0x1]
      %v473 = vsel %vm309, 1, 0
      %v474 = vsel %vm310, 1, 0
      %vm475 = vcmp.eq.s32.totalorder %v473, 1
      %vm476 = vcmp.eq.s32.totalorder %v474, 1
      %vm477 = vmpackc.low %vm475, %vm475
      %vm478 = vmpackc.low %vm476, %vm476
      %v479 = vsel %vm477, 65537, 0
      %v480 = vsel %vm478, 65537, 0
      %vm481 = vsmask.f32 256
      %vm482 = vsmask.f32 4368
      %vm483 = vmor %vm481, %vm482
      %v485 = vshrl.u32 %v479, 16
      %v487 = vrot.slane %v485, 7
      %v488 = vshll.u32 %v479, 16
      %v490 = vor.u32 %v487, %v488
      %v491 = vrot.slane %v487, 4
      %v493 = vshrl.u32 %v480, 16
      %v495 = vrot.slane %v493, 7
      %v496 = vshll.u32 %v480, 16
      %v498 = vor.u32 %v495, %v496
      %v499 = vsel %vm483, %v491, %v498
      %v500 = vrot.slane %v495, 4
      %vm501 = vcmp.ne.s16.totalorder %v490, 0
      %vm502 = vcmp.ne.s16.totalorder %v499, 0
      %vm503 = vcmp.ne.s16.totalorder %v500, 0
      %v504 = vsel %vm501, %v470, 0
      %v505 = vsel %vm502, %v471, 0
      %v506 = vsel %vm503, %v472, 0
      %v507 = vld [vmem:[#allocation2] sm:$0xc]
      %v508 = vld [vmem:[#allocation2 + $0x8] sm:$0x3]
      %v509 = vld [vmem:[#allocation2 + $0x8] sm:$0x7]
      %vm510 = vsmask.f32 6416
      %vm511 = vmor %vm465, %vm510
      %v512 = vrot.slane %v485, 5
      %v513 = vrot.slane %v488, 6
      %v514 = vor.u32 %v512, %v513
      %v515 = vrot.slane %v514, 4
      %v516 = vrot.slane %v493, 5
      %v517 = vrot.slane %v496, 6
      %v518 = vor.u32 %v516, %v517
      %v519 = vsel %vm511, %v515, %v518
      %v520 = vrot.slane %v518, 4
      %vm521 = vcmp.ne.s16.totalorder %v514, 0
      %vm522 = vcmp.ne.s16.totalorder %v519, 0
      %vm523 = vcmp.ne.s16.totalorder %v520, 0
      %v524 = vsel %vm521, %v507, 0
      %v525 = vsel %vm522, %v471, 0
      %v526 = vsel %vm523, %v509, 0
      %v527 = vld [vmem:[%s2] sm:$0xf]
      %v528 = vld [vmem:[%s2 + $0x4] sm:$0xf]
      %v529 = vld [vmem:[%s2 + $0x8] sm:$0xf]
      %v530 = vld [vmem:[%s2 + $0xc] sm:$0xf]
      %v531 = vld [vmem:[%s2 + $0x10] sm:$0xf]
      %v532 = vld [vmem:[%s2 + $0x14] sm:$0xf]
      %v533 = vld [vmem:[%s2 + $0x18] sm:$0xf]
      %v534 = vld [vmem:[%s2 + $0x1c] sm:$0xf]
      %v537 = vunpack.c.l.b16 %v470
      %v538 = vunpack.c.l.b16 %v471
      %v539 = vpack.c.b16 %v538, %v537
      %v548 = vunpack.c.l.b16 %v527
      %v549 = vunpack.c.l.b16 %v528
      %v550 = vunpack.c.l.b16 %v529
      %v551 = vunpack.c.l.b16 %v530
      %v552 = vunpack.c.l.b16 %v531
      %v553 = vunpack.c.l.b16 %v532
      %v554 = vunpack.c.l.b16 %v533
      %v555 = vunpack.c.l.b16 %v534
      %v556 = vpack.c.b16 %v549, %v548
      %v557 = vpack.c.b16 %v551, %v550
      %v558 = vpack.c.b16 %v553, %v552
      %v559 = vpack.c.b16 %v555, %v554
      %vm564 = vcmask 523264
      %v566 = vsel %vm564, %v539, 0
      %568 = vmatprep.subr.bf16.mxu0 0
      %569 = vmatpush1.bf16.msra.mxu0 0
      %570 = vmatprep.subr.bf16.mxu0 0
      %571 = vmatpush1.bf16.msra.mxu0 0
      %572 = vmatprep.subr.bf16.mxu0 0
      %573 = vmatpush1.bf16.msra.mxu0 0
      %574 = vmatprep.subr.bf16.mxu0 0
      %575 = vmatpush1.bf16.msra.mxu0 0
      %576 = vmatprep.subr.bf16.mxu0 0
      %577 = vmatpush1.bf16.msra.mxu0 %v559
      %578 = vmatprep.subr.bf16.mxu0 0
      %579 = vmatpush1.bf16.msra.mxu0 %v558
      %580 = vmatprep.subr.bf16.mxu0 0
      %581 = vmatpush1.bf16.msra.mxu0 %v557
      %582 = vmatprep.subr.bf16.mxu0 0
      %583 = vmatpush1.bf16.msra.mxu0 %v556
      %584 = vmatprep.subr.bf16.mxu0 0
      %585 = vmatpush2.bf16.msra.mxu0 0
      %586 = vmatprep.subr.bf16.mxu0 0
      %587 = vmatpush2.bf16.msra.mxu0 0
      %588 = vmatprep.subr.bf16.mxu0 0
      %589 = vmatpush2.bf16.msra.mxu0 0
      %590 = vmatprep.subr.bf16.mxu0 0
      %591 = vmatpush2.bf16.msra.mxu0 0
      %592 = vmatprep.subr.bf16.mxu0 0
      %593 = vmatpush2.bf16.msra.mxu0 0
      %594 = vmatprep.subr.bf16.mxu0 0
      %595 = vmatpush2.bf16.msra.mxu0 0
      %596 = vmatprep.subr.bf16.mxu0 0
      %597 = vmatpush2.bf16.msra.mxu0 0
      %598 = vmatprep.subr.bf16.mxu0 0
      %599 = vmatpush2.bf16.msra.mxu0 0
      %600 = vmatprep.mubr.bf16.mxu0 0
      %601 = vmatmul.mubr.bf16.gmra.mxu0 %v566
      %v602 = vpop.f32.mrf.mxu0
      %v603 = vadd.f32 0.0, %v602
      %v604 = vpop.f32.mrf.mxu0
      %v605 = vpop.f32.mrf.mxu0
      %v606 = vadd.f32 0.0, %v605
      %v607 = vpop.f32.mrf.mxu0
      %608 = vdwg.mxu0
      %v612 = vunpack.c.l.b16 %v504
      %v613 = vunpack.c.l.b16 %v505
      %v614 = vunpack.c.l.b16 %v506
      %v615 = vpack.c.b16 %v613, %v612
      %v616 = vpack.c.b16 %v614, %v614
      %vm617 = vsmask.f32 7424
      %v619 = vshrl.u32 %v615, 16
      %v621 = vshll.u32 %v615, 16
      %v623 = vrot.slane %v621, 1
      %v624 = vor.u32 %v619, %v623
      %v626 = vshll.u32 %v616, 16
      %v628 = vrot.slane %v626, 1
      %v629 = vsel %vm617, %v624, %v628
      %630 = vrot.lane.b32.xlu0 %v629, 64
      %v631 = vpop.permute.xlu0 %630
      %v633 = vsel %vm564, %v539, %v631
      %v635 = vld [vmem:[%s3] sm:$0xf]
      %v636 = vld [vmem:[%s3 + $0x4] sm:$0xf]
      %v637 = vld [vmem:[%s3 + $0x8] sm:$0xf]
      %v638 = vld [vmem:[%s3 + $0xc] sm:$0xf]
      %v639 = vld [vmem:[%s3 + $0x10] sm:$0xf]
      %v640 = vld [vmem:[%s3 + $0x14] sm:$0xf]
      %v641 = vld [vmem:[%s3 + $0x18] sm:$0xf]
      %v642 = vld [vmem:[%s3 + $0x1c] sm:$0xf]
      %v643 = vld [vmem:[%s3 + $0x20] sm:$0xf]
      %v644 = vld [vmem:[%s3 + $0x24] sm:$0xf]
      %v645 = vld [vmem:[%s3 + $0x28] sm:$0xf]
      %v646 = vld [vmem:[%s3 + $0x2c] sm:$0xf]
      %v647 = vld [vmem:[%s3 + $0x30] sm:$0xf]
      %v648 = vld [vmem:[%s3 + $0x34] sm:$0xf]
      %v649 = vld [vmem:[%s3 + $0x38] sm:$0xf]
      %v650 = vld [vmem:[%s3 + $0x3c] sm:$0xf]
      %v667 = vunpack.c.l.b16 %v635
      %v668 = vunpack.c.l.b16 %v636
      %v669 = vunpack.c.l.b16 %v637
      %v670 = vunpack.c.l.b16 %v638
      %v671 = vunpack.c.l.b16 %v639
      %v672 = vunpack.c.l.b16 %v640
      %v673 = vunpack.c.l.b16 %v641
      %v674 = vunpack.c.l.b16 %v642
      %v675 = vunpack.c.l.b16 %v643
      %v676 = vunpack.c.l.b16 %v644
      %v677 = vunpack.c.l.b16 %v645
      %v678 = vunpack.c.l.b16 %v646
      %v679 = vunpack.c.l.b16 %v647
      %v680 = vunpack.c.l.b16 %v648
      %v681 = vunpack.c.l.b16 %v649
      %v682 = vunpack.c.l.b16 %v650
      %v683 = vpack.c.b16 %v668, %v667
      %v684 = vpack.c.b16 %v670, %v669
      %v685 = vpack.c.b16 %v672, %v671
      %v686 = vpack.c.b16 %v674, %v673
      %v687 = vpack.c.b16 %v676, %v675
      %v688 = vpack.c.b16 %v678, %v677
      %v689 = vpack.c.b16 %v680, %v679
      %v690 = vpack.c.b16 %v682, %v681
      %699 = vmatprep.subr.bf16.mxu0 0
      %700 = vmatpush1.bf16.msra.mxu0 %v690
      %701 = vmatprep.subr.bf16.mxu0 0
      %702 = vmatpush1.bf16.msra.mxu0 %v689
      %703 = vmatprep.subr.bf16.mxu0 0
      %704 = vmatpush1.bf16.msra.mxu0 %v688
      %705 = vmatprep.subr.bf16.mxu0 0
      %706 = vmatpush1.bf16.msra.mxu0 %v687
      %707 = vmatprep.subr.bf16.mxu0 0
      %708 = vmatpush1.bf16.msra.mxu0 %v686
      %709 = vmatprep.subr.bf16.mxu0 0
      %710 = vmatpush1.bf16.msra.mxu0 %v685
      %711 = vmatprep.subr.bf16.mxu0 0
      %712 = vmatpush1.bf16.msra.mxu0 %v684
      %713 = vmatprep.subr.bf16.mxu0 0
      %714 = vmatpush1.bf16.msra.mxu0 %v683
      %715 = vmatprep.subr.bf16.mxu0 0
      %716 = vmatpush2.bf16.msra.mxu0 0
      %717 = vmatprep.subr.bf16.mxu0 0
      %718 = vmatpush2.bf16.msra.mxu0 0
      %719 = vmatprep.subr.bf16.mxu0 0
      %720 = vmatpush2.bf16.msra.mxu0 0
      %721 = vmatprep.subr.bf16.mxu0 0
      %722 = vmatpush2.bf16.msra.mxu0 0
      %723 = vmatprep.subr.bf16.mxu0 0
      %724 = vmatpush2.bf16.msra.mxu0 0
      %725 = vmatprep.subr.bf16.mxu0 0
      %726 = vmatpush2.bf16.msra.mxu0 0
      %727 = vmatprep.subr.bf16.mxu0 0
      %728 = vmatpush2.bf16.msra.mxu0 0
      %729 = vmatprep.subr.bf16.mxu0 0
      %730 = vmatpush2.bf16.msra.mxu0 0
      %731 = vmatprep.mubr.bf16.mxu0 0
      %732 = vmatmul.mubr.bf16.gmra.mxu0 %v633
      %v733 = vpop.f32.mrf.mxu0
      %v734 = vadd.f32 0.0, %v733
      %v735 = vpop.f32.mrf.mxu0
      %v736 = vpop.f32.mrf.mxu0
      %v737 = vadd.f32 0.0, %v736
      %v738 = vpop.f32.mrf.mxu0
      %739 = vdwg.mxu0
      %v742 = vunpack.c.l.b16 %v507
      %v743 = vunpack.c.l.b16 %v508
      %v744 = vpack.c.b16 %v538, %v742
      %v745 = vpack.c.b16 %v743, %v743
      %vm746 = vcmask 1045504
      %v747 = vrot.slane %v744, 2
      %v748 = vrot.slane %v745, 2
      %v749 = vsel %vm746, %v747, %v748
      %750 = vrot.lane.b32.xlu0 %v749, 64
      %v751 = vpop.permute.xlu0 %750
      %v753 = vsel %vm564, %v539, %v751
      %v755 = vld [vmem:[%s4] sm:$0xf]
      %v756 = vld [vmem:[%s4 + $0x4] sm:$0xf]
      %v757 = vld [vmem:[%s4 + $0x8] sm:$0xf]
      %v758 = vld [vmem:[%s4 + $0xc] sm:$0xf]
      %v759 = vld [vmem:[%s4 + $0x10] sm:$0xf]
      %v760 = vld [vmem:[%s4 + $0x14] sm:$0xf]
      %v761 = vld [vmem:[%s4 + $0x18] sm:$0xf]
      %v762 = vld [vmem:[%s4 + $0x1c] sm:$0xf]
      %v763 = vld [vmem:[%s4 + $0x20] sm:$0xf]
      %v764 = vld [vmem:[%s4 + $0x24] sm:$0xf]
      %v765 = vld [vmem:[%s4 + $0x28] sm:$0xf]
      %v766 = vld [vmem:[%s4 + $0x2c] sm:$0xf]
      %v767 = vld [vmem:[%s4 + $0x30] sm:$0xf]
      %v768 = vld [vmem:[%s4 + $0x34] sm:$0xf]
      %v769 = vld [vmem:[%s4 + $0x38] sm:$0xf]
      %v770 = vld [vmem:[%s4 + $0x3c] sm:$0xf]
      %v787 = vunpack.c.l.b16 %v755
      %v788 = vunpack.c.l.b16 %v756
      %v789 = vunpack.c.l.b16 %v757
      %v790 = vunpack.c.l.b16 %v758
      %v791 = vunpack.c.l.b16 %v759
      %v792 = vunpack.c.l.b16 %v760
      %v793 = vunpack.c.l.b16 %v761
      %v794 = vunpack.c.l.b16 %v762
      %v795 = vunpack.c.l.b16 %v763
      %v796 = vunpack.c.l.b16 %v764
      %v797 = vunpack.c.l.b16 %v765
      %v798 = vunpack.c.l.b16 %v766
      %v799 = vunpack.c.l.b16 %v767
      %v800 = vunpack.c.l.b16 %v768
      %v801 = vunpack.c.l.b16 %v769
      %v802 = vunpack.c.l.b16 %v770
      %v803 = vpack.c.b16 %v788, %v787
      %v804 = vpack.c.b16 %v790, %v789
      %v805 = vpack.c.b16 %v792, %v791
      %v806 = vpack.c.b16 %v794, %v793
      %v807 = vpack.c.b16 %v796, %v795
      %v808 = vpack.c.b16 %v798, %v797
      %v809 = vpack.c.b16 %v800, %v799
      %v810 = vpack.c.b16 %v802, %v801
      %819 = vmatprep.subr.bf16.mxu0 0
      %820 = vmatpush1.bf16.msra.mxu0 %v810
      %821 = vmatprep.subr.bf16.mxu0 0
      %822 = vmatpush1.bf16.msra.mxu0 %v809
      %823 = vmatprep.subr.bf16.mxu0 0
      %824 = vmatpush1.bf16.msra.mxu0 %v808
      %825 = vmatprep.subr.bf16.mxu0 0
      %826 = vmatpush1.bf16.msra.mxu0 %v807
      %827 = vmatprep.subr.bf16.mxu0 0
      %828 = vmatpush1.bf16.msra.mxu0 %v806
      %829 = vmatprep.subr.bf16.mxu0 0
      %830 = vmatpush1.bf16.msra.mxu0 %v805
      %831 = vmatprep.subr.bf16.mxu0 0
      %832 = vmatpush1.bf16.msra.mxu0 %v804
      %833 = vmatprep.subr.bf16.mxu0 0
      %834 = vmatpush1.bf16.msra.mxu0 %v803
      %835 = vmatprep.subr.bf16.mxu0 0
      %836 = vmatpush2.bf16.msra.mxu0 0
      %837 = vmatprep.subr.bf16.mxu0 0
      %838 = vmatpush2.bf16.msra.mxu0 0
      %839 = vmatprep.subr.bf16.mxu0 0
      %840 = vmatpush2.bf16.msra.mxu0 0
      %841 = vmatprep.subr.bf16.mxu0 0
      %842 = vmatpush2.bf16.msra.mxu0 0
      %843 = vmatprep.subr.bf16.mxu0 0
      %844 = vmatpush2.bf16.msra.mxu0 0
      %845 = vmatprep.subr.bf16.mxu0 0
      %846 = vmatpush2.bf16.msra.mxu0 0
      %847 = vmatprep.subr.bf16.mxu0 0
      %848 = vmatpush2.bf16.msra.mxu0 0
      %849 = vmatprep.subr.bf16.mxu0 0
      %850 = vmatpush2.bf16.msra.mxu0 0
      %851 = vmatprep.mubr.bf16.mxu0 0
      %852 = vmatmul.mubr.bf16.gmra.mxu0 %v753
      %v853 = vpop.f32.mrf.mxu0
      %v854 = vadd.f32 0.0, %v853
      %v855 = vpop.f32.mrf.mxu0
      %v856 = vpop.f32.mrf.mxu0
      %v857 = vadd.f32 0.0, %v856
      %v858 = vpop.f32.mrf.mxu0
      %859 = vdwg.mxu0
      %v863 = vunpack.c.l.b16 %v524
      %v864 = vunpack.c.l.b16 %v525
      %v865 = vunpack.c.l.b16 %v526
      %v866 = vpack.c.b16 %v864, %v863
      %v867 = vpack.c.b16 %v865, %v865
      %vm868 = vsmask.f32 5376
      %v870 = vshrl.u32 %v866, 16
      %v872 = vrot.slane %v870, 2
      %v873 = vshll.u32 %v866, 16
      %v875 = vrot.slane %v873, 3
      %v876 = vor.u32 %v872, %v875
      %v878 = vshrl.u32 %v867, 16
      %v880 = vrot.slane %v878, 2
      %v881 = vshll.u32 %v867, 16
      %v883 = vrot.slane %v881, 3
      %v884 = vor.u32 %v880, %v883
      %v885 = vsel %vm868, %v876, %v884
      %886 = vrot.lane.b32.xlu0 %v885, 64
      %v887 = vpop.permute.xlu0 %886
      %v890 = vsel %vm564, %v749, %v887
      %v892 = vld [vmem:[%s5] sm:$0xf]
      %v893 = vld [vmem:[%s5 + $0x4] sm:$0xf]
      %v894 = vld [vmem:[%s5 + $0x8] sm:$0xf]
      %v895 = vld [vmem:[%s5 + $0xc] sm:$0xf]
      %v896 = vld [vmem:[%s5 + $0x10] sm:$0xf]
      %v897 = vld [vmem:[%s5 + $0x14] sm:$0xf]
      %v898 = vld [vmem:[%s5 + $0x18] sm:$0xf]
      %v899 = vld [vmem:[%s5 + $0x1c] sm:$0xf]
      %v900 = vld [vmem:[%s5 + $0x20] sm:$0xf]
      %v901 = vld [vmem:[%s5 + $0x24] sm:$0xf]
      %v902 = vld [vmem:[%s5 + $0x28] sm:$0xf]
      %v903 = vld [vmem:[%s5 + $0x2c] sm:$0xf]
      %v904 = vld [vmem:[%s5 + $0x30] sm:$0xf]
      %v905 = vld [vmem:[%s5 + $0x34] sm:$0xf]
      %v906 = vld [vmem:[%s5 + $0x38] sm:$0xf]
      %v907 = vld [vmem:[%s5 + $0x3c] sm:$0xf]
      %v908 = vld [vmem:[%s5 + $0x40] sm:$0xf]
      %v909 = vld [vmem:[%s5 + $0x44] sm:$0xf]
      %v910 = vld [vmem:[%s5 + $0x48] sm:$0xf]
      %v911 = vld [vmem:[%s5 + $0x4c] sm:$0xf]
      %v912 = vld [vmem:[%s5 + $0x50] sm:$0xf]
      %v913 = vld [vmem:[%s5 + $0x54] sm:$0xf]
      %v914 = vld [vmem:[%s5 + $0x58] sm:$0xf]
      %v915 = vld [vmem:[%s5 + $0x5c] sm:$0xf]
      %v916 = vld [vmem:[%s5 + $0x60] sm:$0xf]
      %v917 = vld [vmem:[%s5 + $0x64] sm:$0xf]
      %v918 = vld [vmem:[%s5 + $0x68] sm:$0xf]
      %v919 = vld [vmem:[%s5 + $0x6c] sm:$0xf]
      %v920 = vld [vmem:[%s5 + $0x70] sm:$0xf]
      %v921 = vld [vmem:[%s5 + $0x74] sm:$0xf]
      %v922 = vld [vmem:[%s5 + $0x78] sm:$0xf]
      %v923 = vld [vmem:[%s5 + $0x7c] sm:$0xf]
      %v956 = vunpack.c.l.b16 %v892
      %v957 = vunpack.c.l.b16 %v893
      %v958 = vunpack.c.l.b16 %v894
      %v959 = vunpack.c.l.b16 %v895
      %v960 = vunpack.c.l.b16 %v896
      %v961 = vunpack.c.l.b16 %v897
      %v962 = vunpack.c.l.b16 %v898
      %v963 = vunpack.c.l.b16 %v899
      %v964 = vunpack.c.l.b16 %v900
      %v965 = vunpack.c.l.b16 %v901
      %v966 = vunpack.c.l.b16 %v902
      %v967 = vunpack.c.l.b16 %v903
      %v968 = vunpack.c.l.b16 %v904
      %v969 = vunpack.c.l.b16 %v905
      %v970 = vunpack.c.l.b16 %v906
      %v971 = vunpack.c.l.b16 %v907
      %v972 = vunpack.c.l.b16 %v908
      %v973 = vunpack.c.l.b16 %v909
      %v974 = vunpack.c.l.b16 %v910
      %v975 = vunpack.c.l.b16 %v911
      %v976 = vunpack.c.l.b16 %v912
      %v977 = vunpack.c.l.b16 %v913
      %v978 = vunpack.c.l.b16 %v914
      %v979 = vunpack.c.l.b16 %v915
      %v980 = vunpack.c.l.b16 %v916
      %v981 = vunpack.c.l.b16 %v917
      %v982 = vunpack.c.l.b16 %v918
      %v983 = vunpack.c.l.b16 %v919
      %v984 = vunpack.c.l.b16 %v920
      %v985 = vunpack.c.l.b16 %v921
      %v986 = vunpack.c.l.b16 %v922
      %v987 = vunpack.c.l.b16 %v923
      %v988 = vpack.c.b16 %v957, %v956
      %v989 = vpack.c.b16 %v959, %v958
      %v990 = vpack.c.b16 %v961, %v960
      %v991 = vpack.c.b16 %v963, %v962
      %v992 = vpack.c.b16 %v965, %v964
      %v993 = vpack.c.b16 %v967, %v966
      %v994 = vpack.c.b16 %v969, %v968
      %v995 = vpack.c.b16 %v971, %v970
      %v996 = vpack.c.b16 %v973, %v972
      %v997 = vpack.c.b16 %v975, %v974
      %v998 = vpack.c.b16 %v977, %v976
      %v999 = vpack.c.b16 %v979, %v978
      %v1000 = vpack.c.b16 %v981, %v980
      %v1001 = vpack.c.b16 %v983, %v982
      %v1002 = vpack.c.b16 %v985, %v984
      %v1003 = vpack.c.b16 %v987, %v986
      %1020 = vmatprep.subr.bf16.mxu0 0
      %1021 = vmatpush1.bf16.msra.mxu0 %v995
      %1022 = vmatprep.subr.bf16.mxu0 0
      %1023 = vmatpush1.bf16.msra.mxu0 %v994
      %1024 = vmatprep.subr.bf16.mxu0 0
      %1025 = vmatpush1.bf16.msra.mxu0 %v993
      %1026 = vmatprep.subr.bf16.mxu0 0
      %1027 = vmatpush1.bf16.msra.mxu0 %v992
      %1028 = vmatprep.subr.bf16.mxu0 0
      %1029 = vmatpush1.bf16.msra.mxu0 %v991
      %1030 = vmatprep.subr.bf16.mxu0 0
      %1031 = vmatpush1.bf16.msra.mxu0 %v990
      %1032 = vmatprep.subr.bf16.mxu0 0
      %1033 = vmatpush1.bf16.msra.mxu0 %v989
      %1034 = vmatprep.subr.bf16.mxu0 0
      %1035 = vmatpush1.bf16.msra.mxu0 %v988
      %1036 = vmatprep.subr.bf16.mxu0 0
      %1037 = vmatpush2.bf16.msra.mxu0 %v1003
      %1038 = vmatprep.subr.bf16.mxu0 0
      %1039 = vmatpush2.bf16.msra.mxu0 %v1002
      %1040 = vmatprep.subr.bf16.mxu0 0
      %1041 = vmatpush2.bf16.msra.mxu0 %v1001
      %1042 = vmatprep.subr.bf16.mxu0 0
      %1043 = vmatpush2.bf16.msra.mxu0 %v1000
      %1044 = vmatprep.subr.bf16.mxu0 0
      %1045 = vmatpush2.bf16.msra.mxu0 %v999
      %1046 = vmatprep.subr.bf16.mxu0 0
      %1047 = vmatpush2.bf16.msra.mxu0 %v998
      %1048 = vmatprep.subr.bf16.mxu0 0
      %1049 = vmatpush2.bf16.msra.mxu0 %v997
      %1050 = vmatprep.subr.bf16.mxu0 0
      %1051 = vmatpush2.bf16.msra.mxu0 %v996
      %1052 = vmatprep.mubr.bf16.mxu0 %v890
      %1053 = vmatmul.mubr.bf16.gmra.mxu0 %v633
      %v1054 = vpop.f32.mrf.mxu0
      %v1055 = vadd.f32 0.0, %v1054
      %v1056 = vpop.f32.mrf.mxu0
      %v1057 = vpop.f32.mrf.mxu0
      %v1058 = vadd.f32 0.0, %v1057
      %v1059 = vpop.f32.mrf.mxu0
      %1060 = vdwg.mxu0
      %v1061 = vpack.c.bf16 %v606, %v603
      %v1063 = vunpack.c.l.b16 %v1061
      %v1064 = vunpack.c.h.b16 %v1061
      %v1065 = vpack.c.b16 %v1063, %v1063
      %v1066 = vpack.c.b16 %v1064, %v1064
      %1069 = vst [vmem:[#allocation3] sm:$0xf] %v1065
      %1070 = vst [vmem:[#allocation3 + $0x4] sm:$0xf] %v1066
      %vm1071 = vcmask 1042432
      %vm1072 = vmand %vm1071, %vm465
      %v1073 = vld [vmem:[#allocation3 + $0x8] sm:$0x7]
      %v1074 = vsel %vm1072, 0, %v1073
      %1075 = vst [vmem:[#allocation3 + $0x8] sm:$0x7] %v1074
      %v1076 = vpack.c.bf16 %v737, %v734
      %v1078 = vunpack.c.l.b16 %v1076
      %v1079 = vunpack.c.h.b16 %v1076
      %v1080 = vpack.c.b16 %v1078, %v1078
      %v1081 = vpack.c.b16 %v1079, %v1079
      %s1084 = scalar_lea.vmem [#allocation3], 12
      %1085 = vst [vmem:[%s1084] sm:$0xf] %v1080
      %1086 = vst [vmem:[%s1084 + $0x4] sm:$0xf] %v1081
      %v1087 = vld [vmem:[%s1084 + $0x8] sm:$0x7]
      %v1088 = vsel %vm1072, 0, %v1087
      %1089 = vst [vmem:[%s1084 + $0x8] sm:$0x7] %v1088
      %v1090 = vpack.c.bf16 %v857, %v854
      %v1092 = vunpack.c.l.b16 %v1090
      %v1093 = vunpack.c.h.b16 %v1090
      %v1094 = vpack.c.b16 %v1092, %v1092
      %v1095 = vpack.c.b16 %v1093, %v1093
      %s1098 = scalar_lea.vmem [#allocation3], 24
      %1099 = vst [vmem:[%s1098] sm:$0xf] %v1094
      %1100 = vst [vmem:[%s1098 + $0x4] sm:$0xf] %v1095
      %v1101 = vld [vmem:[%s1098 + $0x8] sm:$0x7]
      %v1102 = vsel %vm1072, 0, %v1101
      %1103 = vst [vmem:[%s1098 + $0x8] sm:$0x7] %v1102
      %v1104 = vpack.c.bf16 %v1058, %v1055
      %v1106 = vunpack.c.l.b16 %v1104
      %v1107 = vunpack.c.h.b16 %v1104
      %v1108 = vpack.c.b16 %v1106, %v1106
      %v1109 = vpack.c.b16 %v1107, %v1107
      %s1112 = scalar_lea.vmem [#allocation3], 36
      %1113 = vst [vmem:[%s1112] sm:$0xf] %v1108
      %1114 = vst [vmem:[%s1112 + $0x4] sm:$0xf] %v1109
      %v1115 = vld [vmem:[%s1112 + $0x8] sm:$0x7]
      %v1116 = vsel %vm1072, 0, %v1115
      %1117 = vst [vmem:[%s1112 + $0x8] sm:$0x7] %v1116
      %v1118 = vld [vmem:[#allocation3] sm:$0xf]
      %v1119 = vld [vmem:[#allocation3 + $0x4] sm:$0xf]
      %v1120 = vld [vmem:[%s6] sm:$0xf]
      %v1121 = vld [vmem:[%s6 + $0x4] sm:$0xf]
      %v1122 = vld [vmem:[%s6 + $0x8] sm:$0xf]
      %v1123 = vld [vmem:[%s6 + $0xc] sm:$0xf]
      %v1124 = vld [vmem:[%s6 + $0x10] sm:$0xf]
      %v1125 = vld [vmem:[%s6 + $0x14] sm:$0xf]
      %v1126 = vld [vmem:[%s1084] sm:$0xf]
      %v1127 = vld [vmem:[%s1084 + $0x4] sm:$0xf]
      %s1128 = scalar_lea.vmem %s6, 24
      %v1129 = vld [vmem:[%s1128] sm:$0xf]
      %v1130 = vld [vmem:[%s1128 + $0x4] sm:$0xf]
      %v1131 = vld [vmem:[%s1128 + $0x8] sm:$0xf]
      %v1132 = vld [vmem:[%s1128 + $0xc] sm:$0xf]
      %v1133 = vld [vmem:[%s1128 + $0x10] sm:$0xf]
      %v1134 = vld [vmem:[%s1128 + $0x14] sm:$0xf]
      %v1141 = vunpack.c.l.b16 %v1129
      %v1142 = vunpack.c.l.b16 %v1130
      %v1143 = vunpack.c.l.b16 %v1131
      %v1144 = vunpack.c.l.b16 %v1132
      %v1145 = vunpack.c.l.b16 %v1133
      %v1146 = vunpack.c.l.b16 %v1134
      %v1147 = vpack.c.b16 %v1142, %v1141
      %v1148 = vpack.c.b16 %v1144, %v1143
      %v1149 = vpack.c.b16 %v1146, %v1145
      %v1155 = vunpack.c.l.b16 %v1126
      %v1156 = vunpack.c.l.b16 %v1127
      %v1157 = vpack.c.b16 %v1156, %v1155
      %1159 = vmatprep.subr.bf16.mxu0 0
      %1160 = vmatpush1.bf16.xpose.msra.mxu0 0
      %1161 = vmatprep.subr.bf16.mxu0 0
      %1162 = vmatpush1.bf16.xpose.msra.mxu0 0
      %1163 = vmatprep.subr.bf16.mxu0 0
      %1164 = vmatpush1.bf16.xpose.msra.mxu0 0
      %1165 = vmatprep.subr.bf16.mxu0 0
      %1166 = vmatpush1.bf16.xpose.msra.mxu0 0
      %1167 = vmatprep.subr.bf16.mxu0 0
      %1168 = vmatpush1.bf16.xpose.msra.mxu0 0
      %1169 = vmatprep.subr.bf16.mxu0 0
      %1170 = vmatpush1.bf16.xpose.msra.mxu0 0
      %1171 = vmatprep.subr.bf16.mxu0 0
      %1172 = vmatpush1.bf16.xpose.msra.mxu0 0
      %1173 = vmatprep.subr.bf16.mxu0 0
      %1174 = vmatpush1.bf16.xpose.msra.mxu0 %v1157
      %1175 = vmatprep.subr.bf16.mxu0 0
      %1176 = vmatpush2.bf16.xpose.msra.mxu0 0
      %1177 = vmatprep.subr.bf16.mxu0 0
      %1178 = vmatpush2.bf16.xpose.msra.mxu0 0
      %1179 = vmatprep.subr.bf16.mxu0 0
      %1180 = vmatpush2.bf16.xpose.msra.mxu0 0
      %1181 = vmatprep.subr.bf16.mxu0 0
      %1182 = vmatpush2.bf16.xpose.msra.mxu0 0
      %1183 = vmatprep.subr.bf16.mxu0 0
      %1184 = vmatpush2.bf16.xpose.msra.mxu0 0
      %1185 = vmatprep.subr.bf16.mxu0 0
      %1186 = vmatpush2.bf16.xpose.msra.mxu0 0
      %1187 = vmatprep.subr.bf16.mxu0 0
      %1188 = vmatpush2.bf16.xpose.msra.mxu0 0
      %1189 = vmatprep.subr.bf16.mxu0 0
      %1190 = vmatpush2.bf16.xpose.msra.mxu0 0
      %1191 = vmatprep.mubr.bf16.mxu0 0
      %1192 = vmatmul.mubr.bf16.gmra.mxu0 %v1147
      %v1193 = vpop.f32.mrf.mxu0
      %v1194 = vadd.f32 0.0, %v1193
      %v1195 = vpop.f32.mrf.mxu0
      %v1196 = vpop.f32.mrf.mxu0
      %v1197 = vadd.f32 0.0, %v1196
      %v1198 = vpop.f32.mrf.mxu0
      %1199 = vmatprep.mubr.bf16.mxu0 0
      %1200 = vmatmul.mubr.bf16.gmra.mxu0 %v1148
      %v1201 = vpop.f32.mrf.mxu0
      %v1202 = vadd.f32 0.0, %v1201
      %v1203 = vpop.f32.mrf.mxu0
      %v1204 = vpop.f32.mrf.mxu0
      %v1205 = vadd.f32 0.0, %v1204
      %v1206 = vpop.f32.mrf.mxu0
      %1207 = vmatprep.mubr.bf16.mxu0 0
      %1208 = vmatmul.mubr.bf16.gmra.mxu0 %v1149
      %v1209 = vpop.f32.mrf.mxu0
      %v1210 = vadd.f32 0.0, %v1209
      %v1211 = vpop.f32.mrf.mxu0
      %v1212 = vpop.f32.mrf.mxu0
      %v1213 = vadd.f32 0.0, %v1212
      %v1214 = vpop.f32.mrf.mxu0
      %1215 = vdwg.mxu0
      %v1222 = vunpack.c.l.b16 %v1120
      %v1223 = vunpack.c.l.b16 %v1121
      %v1224 = vunpack.c.l.b16 %v1122
      %v1225 = vunpack.c.l.b16 %v1123
      %v1226 = vunpack.c.l.b16 %v1124
      %v1227 = vunpack.c.l.b16 %v1125
      %v1228 = vpack.c.b16 %v1223, %v1222
      %v1229 = vpack.c.b16 %v1225, %v1224
      %v1230 = vpack.c.b16 %v1227, %v1226
      %v1236 = vunpack.c.l.b16 %v1118
      %v1237 = vunpack.c.l.b16 %v1119
      %v1238 = vpack.c.b16 %v1237, %v1236
      %1240 = vmatprep.subr.bf16.mxu0 0
      %1241 = vmatpush1.bf16.xpose.msra.mxu0 0
      %1242 = vmatprep.subr.bf16.mxu0 0
      %1243 = vmatpush1.bf16.xpose.msra.mxu0 0
      %1244 = vmatprep.subr.bf16.mxu0 0
      %1245 = vmatpush1.bf16.xpose.msra.mxu0 0
      %1246 = vmatprep.subr.bf16.mxu0 0
      %1247 = vmatpush1.bf16.xpose.msra.mxu0 0
      %1248 = vmatprep.subr.bf16.mxu0 0
      %1249 = vmatpush1.bf16.xpose.msra.mxu0 0
      %1250 = vmatprep.subr.bf16.mxu0 0
      %1251 = vmatpush1.bf16.xpose.msra.mxu0 0
      %1252 = vmatprep.subr.bf16.mxu0 0
      %1253 = vmatpush1.bf16.xpose.msra.mxu0 0
      %1254 = vmatprep.subr.bf16.mxu0 0
      %1255 = vmatpush1.bf16.xpose.msra.mxu0 %v1238
      %1256 = vmatprep.subr.bf16.mxu0 0
      %1257 = vmatpush2.bf16.xpose.msra.mxu0 0
      %1258 = vmatprep.subr.bf16.mxu0 0
      %1259 = vmatpush2.bf16.xpose.msra.mxu0 0
      %1260 = vmatprep.subr.bf16.mxu0 0
      %1261 = vmatpush2.bf16.xpose.msra.mxu0 0
      %1262 = vmatprep.subr.bf16.mxu0 0
      %1263 = vmatpush2.bf16.xpose.msra.mxu0 0
      %1264 = vmatprep.subr.bf16.mxu0 0
      %1265 = vmatpush2.bf16.xpose.msra.mxu0 0
      %1266 = vmatprep.subr.bf16.mxu0 0
      %1267 = vmatpush2.bf16.xpose.msra.mxu0 0
      %1268 = vmatprep.subr.bf16.mxu0 0
      %1269 = vmatpush2.bf16.xpose.msra.mxu0 0
      %1270 = vmatprep.subr.bf16.mxu0 0
      %1271 = vmatpush2.bf16.xpose.msra.mxu0 0
      %1272 = vmatprep.mubr.bf16.mxu0 0
      %1273 = vmatmul.mubr.bf16.gmra.mxu0 %v1228
      %v1274 = vpop.f32.mrf.mxu0
      %v1275 = vadd.f32 %v1194, %v1274
      %v1276 = vpop.f32.mrf.mxu0
      %v1277 = vpop.f32.mrf.mxu0
      %v1278 = vadd.f32 %v1197, %v1277
      %v1279 = vpop.f32.mrf.mxu0
      %1280 = vmatprep.mubr.bf16.mxu0 0
      %1281 = vmatmul.mubr.bf16.gmra.mxu0 %v1229
      %v1282 = vpop.f32.mrf.mxu0
      %v1283 = vadd.f32 %v1202, %v1282
      %v1284 = vpop.f32.mrf.mxu0
      %v1285 = vpop.f32.mrf.mxu0
      %v1286 = vadd.f32 %v1205, %v1285
      %v1287 = vpop.f32.mrf.mxu0
      %1288 = vmatprep.mubr.bf16.mxu0 0
      %1289 = vmatmul.mubr.bf16.gmra.mxu0 %v1230
      %v1290 = vpop.f32.mrf.mxu0
      %v1291 = vadd.f32 %v1210, %v1290
      %v1292 = vpop.f32.mrf.mxu0
      %v1293 = vpop.f32.mrf.mxu0
      %v1294 = vadd.f32 %v1213, %v1293
      %v1295 = vpop.f32.mrf.mxu0
      %1296 = vdwg.mxu0
      %v1297 = vld [vmem:[#allocation3] sm:$0xf]
      %v1298 = vld [vmem:[#allocation3 + $0x4] sm:$0xf]
      %v1299 = vld [vmem:[#allocation3 + $0x8] sm:$0x1]
      %v1300 = vsel %vm501, %v1297, 0
      %v1301 = vsel %vm502, %v1298, 0
      %v1302 = vsel %vm503, %v1299, 0
      %s1303 = scalar_lea.vmem %s6, 48
      %v1304 = vld [vmem:[%s1303] sm:$0xf]
      %v1305 = vld [vmem:[%s1303 + $0x4] sm:$0xf]
      %v1306 = vld [vmem:[%s1303 + $0x8] sm:$0xf]
      %v1307 = vld [vmem:[%s1303 + $0xc] sm:$0xf]
      %v1308 = vld [vmem:[%s1303 + $0x10] sm:$0xf]
      %v1309 = vld [vmem:[%s1303 + $0x14] sm:$0xf]
      %v1316 = vunpack.c.l.b16 %v1304
      %v1317 = vunpack.c.l.b16 %v1305
      %v1318 = vunpack.c.l.b16 %v1306
      %v1319 = vunpack.c.l.b16 %v1307
      %v1320 = vunpack.c.l.b16 %v1308
      %v1321 = vunpack.c.l.b16 %v1309
      %v1322 = vpack.c.b16 %v1317, %v1316
      %v1323 = vpack.c.b16 %v1319, %v1318
      %v1324 = vpack.c.b16 %v1321, %v1320
      %v1331 = vunpack.c.l.b16 %v1300
      %v1332 = vunpack.c.l.b16 %v1301
      %v1333 = vunpack.c.l.b16 %v1302
      %v1334 = vpack.c.b16 %v1332, %v1331
      %v1335 = vpack.c.b16 %v1333, %v1333
      %v1337 = vshrl.u32 %v1334, 16
      %v1339 = vshll.u32 %v1334, 16
      %v1341 = vrot.slane %v1339, 1
      %v1342 = vor.u32 %v1337, %v1341
      %v1344 = vshll.u32 %v1335, 16
      %v1346 = vrot.slane %v1344, 1
      %v1347 = vsel %vm617, %v1342, %v1346
      %1349 = vmatprep.subr.bf16.mxu0 0
      %1350 = vmatpush1.bf16.xpose.msra.mxu0 0
      %1351 = vmatprep.subr.bf16.mxu0 0
      %1352 = vmatpush1.bf16.xpose.msra.mxu0 0
      %1353 = vmatprep.subr.bf16.mxu0 0
      %1354 = vmatpush1.bf16.xpose.msra.mxu0 0
      %1355 = vmatprep.subr.bf16.mxu0 0
      %1356 = vmatpush1.bf16.xpose.msra.mxu0 0
      %1357 = vmatprep.subr.bf16.mxu0 0
      %1358 = vmatpush1.bf16.xpose.msra.mxu0 0
      %1359 = vmatprep.subr.bf16.mxu0 0
      %1360 = vmatpush1.bf16.xpose.msra.mxu0 0
      %1361 = vmatprep.subr.bf16.mxu0 0
      %1362 = vmatpush1.bf16.xpose.msra.mxu0 0
      %1363 = vmatprep.subr.bf16.mxu0 0
      %1364 = vmatpush1.bf16.xpose.msra.mxu0 %v1347
      %1365 = vmatprep.subr.bf16.mxu0 0
      %1366 = vmatpush2.bf16.xpose.msra.mxu0 0
      %1367 = vmatprep.subr.bf16.mxu0 0
      %1368 = vmatpush2.bf16.xpose.msra.mxu0 0
      %1369 = vmatprep.subr.bf16.mxu0 0
      %1370 = vmatpush2.bf16.xpose.msra.mxu0 0
      %1371 = vmatprep.subr.bf16.mxu0 0
      %1372 = vmatpush2.bf16.xpose.msra.mxu0 0
      %1373 = vmatprep.subr.bf16.mxu0 0
      %1374 = vmatpush2.bf16.xpose.msra.mxu0 0
      %1375 = vmatprep.subr.bf16.mxu0 0
      %1376 = vmatpush2.bf16.xpose.msra.mxu0 0
      %1377 = vmatprep.subr.bf16.mxu0 0
      %1378 = vmatpush2.bf16.xpose.msra.mxu0 0
      %1379 = vmatprep.subr.bf16.mxu0 0
      %1380 = vmatpush2.bf16.xpose.msra.mxu0 0
      %1381 = vmatprep.mubr.bf16.mxu0 0
      %1382 = vmatmul.mubr.bf16.gmra.mxu0 %v1322
      %v1383 = vpop.f32.mrf.mxu0
      %v1384 = vadd.f32 0.0, %v1383
      %v1385 = vpop.f32.mrf.mxu0
      %v1386 = vpop.f32.mrf.mxu0
      %v1387 = vadd.f32 0.0, %v1386
      %v1388 = vpop.f32.mrf.mxu0
      %1389 = vmatprep.mubr.bf16.mxu0 0
      %1390 = vmatmul.mubr.bf16.gmra.mxu0 %v1323
      %v1391 = vpop.f32.mrf.mxu0
      %v1392 = vadd.f32 0.0, %v1391
      %v1393 = vpop.f32.mrf.mxu0
      %v1394 = vpop.f32.mrf.mxu0
      %v1395 = vadd.f32 0.0, %v1394
      %v1396 = vpop.f32.mrf.mxu0
      %1397 = vmatprep.mubr.bf16.mxu0 0
      %1398 = vmatmul.mubr.bf16.gmra.mxu0 %v1324
      %v1399 = vpop.f32.mrf.mxu0
      %v1400 = vadd.f32 0.0, %v1399
      %v1401 = vpop.f32.mrf.mxu0
      %v1402 = vpop.f32.mrf.mxu0
      %v1403 = vadd.f32 0.0, %v1402
      %v1404 = vpop.f32.mrf.mxu0
      %1405 = vdwg.mxu0
      %v1406 = vadd.f32 %v1275, %v1384
      %v1407 = vadd.f32 %v1278, %v1387
      %v1408 = vadd.f32 %v1283, %v1392
      %v1409 = vadd.f32 %v1286, %v1395
      %v1410 = vadd.f32 %v1291, %v1400
      %v1411 = vadd.f32 %v1294, %v1403
      %v1412 = vld [vmem:[%s1098] sm:$0xf]
      %v1413 = vld [vmem:[%s1098 + $0x4] sm:$0xf]
      %s1414 = scalar_lea.vmem %s6, 72
      %v1415 = vld [vmem:[%s1414] sm:$0xf]
      %v1416 = vld [vmem:[%s1414 + $0x4] sm:$0xf]
      %v1417 = vld [vmem:[%s1414 + $0x8] sm:$0xf]
      %v1418 = vld [vmem:[%s1414 + $0xc] sm:$0xf]
      %v1419 = vld [vmem:[%s1414 + $0x10] sm:$0xf]
      %v1420 = vld [vmem:[%s1414 + $0x14] sm:$0xf]
      %v1427 = vunpack.c.l.b16 %v1415
      %v1428 = vunpack.c.l.b16 %v1416
      %v1429 = vunpack.c.l.b16 %v1417
      %v1430 = vunpack.c.l.b16 %v1418
      %v1431 = vunpack.c.l.b16 %v1419
      %v1432 = vunpack.c.l.b16 %v1420
      %v1433 = vpack.c.b16 %v1428, %v1427
      %v1434 = vpack.c.b16 %v1430, %v1429
      %v1435 = vpack.c.b16 %v1432, %v1431
      %v1441 = vunpack.c.l.b16 %v1412
      %v1442 = vunpack.c.l.b16 %v1413
      %v1443 = vpack.c.b16 %v1442, %v1441
      %1445 = vmatprep.subr.bf16.mxu0 0
      %1446 = vmatpush1.bf16.xpose.msra.mxu0 0
      %1447 = vmatprep.subr.bf16.mxu0 0
      %1448 = vmatpush1.bf16.xpose.msra.mxu0 0
      %1449 = vmatprep.subr.bf16.mxu0 0
      %1450 = vmatpush1.bf16.xpose.msra.mxu0 0
      %1451 = vmatprep.subr.bf16.mxu0 0
      %1452 = vmatpush1.bf16.xpose.msra.mxu0 0
      %1453 = vmatprep.subr.bf16.mxu0 0
      %1454 = vmatpush1.bf16.xpose.msra.mxu0 0
      %1455 = vmatprep.subr.bf16.mxu0 0
      %1456 = vmatpush1.bf16.xpose.msra.mxu0 0
      %1457 = vmatprep.subr.bf16.mxu0 0
      %1458 = vmatpush1.bf16.xpose.msra.mxu0 0
      %1459 = vmatprep.subr.bf16.mxu0 0
      %1460 = vmatpush1.bf16.xpose.msra.mxu0 %v1443
      %1461 = vmatprep.subr.bf16.mxu0 0
      %1462 = vmatpush2.bf16.xpose.msra.mxu0 0
      %1463 = vmatprep.subr.bf16.mxu0 0
      %1464 = vmatpush2.bf16.xpose.msra.mxu0 0
      %1465 = vmatprep.subr.bf16.mxu0 0
      %1466 = vmatpush2.bf16.xpose.msra.mxu0 0
      %1467 = vmatprep.subr.bf16.mxu0 0
      %1468 = vmatpush2.bf16.xpose.msra.mxu0 0
      %1469 = vmatprep.subr.bf16.mxu0 0
      %1470 = vmatpush2.bf16.xpose.msra.mxu0 0
      %1471 = vmatprep.subr.bf16.mxu0 0
      %1472 = vmatpush2.bf16.xpose.msra.mxu0 0
      %1473 = vmatprep.subr.bf16.mxu0 0
      %1474 = vmatpush2.bf16.xpose.msra.mxu0 0
      %1475 = vmatprep.subr.bf16.mxu0 0
      %1476 = vmatpush2.bf16.xpose.msra.mxu0 0
      %1477 = vmatprep.mubr.bf16.mxu0 0
      %1478 = vmatmul.mubr.bf16.gmra.mxu0 %v1433
      %v1479 = vpop.f32.mrf.mxu0
      %v1480 = vadd.f32 0.0, %v1479
      %v1481 = vpop.f32.mrf.mxu0
      %v1482 = vpop.f32.mrf.mxu0
      %v1483 = vadd.f32 0.0, %v1482
      %v1484 = vpop.f32.mrf.mxu0
      %1485 = vmatprep.mubr.bf16.mxu0 0
      %1486 = vmatmul.mubr.bf16.gmra.mxu0 %v1434
      %v1487 = vpop.f32.mrf.mxu0
      %v1488 = vadd.f32 0.0, %v1487
      %v1489 = vpop.f32.mrf.mxu0
      %v1490 = vpop.f32.mrf.mxu0
      %v1491 = vadd.f32 0.0, %v1490
      %v1492 = vpop.f32.mrf.mxu0
      %1493 = vmatprep.mubr.bf16.mxu0 0
      %1494 = vmatmul.mubr.bf16.gmra.mxu0 %v1435
      %v1495 = vpop.f32.mrf.mxu0
      %v1496 = vadd.f32 0.0, %v1495
      %v1497 = vpop.f32.mrf.mxu0
      %v1498 = vpop.f32.mrf.mxu0
      %v1499 = vadd.f32 0.0, %v1498
      %v1500 = vpop.f32.mrf.mxu0
      %1501 = vdwg.mxu0
      %v1502 = vadd.f32 %v1406, %v1480
      %v1503 = vadd.f32 %v1407, %v1483
      %v1504 = vadd.f32 %v1408, %v1488
      %v1505 = vadd.f32 %v1409, %v1491
      %v1506 = vadd.f32 %v1410, %v1496
      %v1507 = vadd.f32 %v1411, %v1499
      %v1508 = vld [vmem:[%s1112] sm:$0xf]
      %v1509 = vld [vmem:[%s1112 + $0x4] sm:$0xf]
      %s1510 = scalar_lea.vmem %s6, 96
      %v1511 = vld [vmem:[%s1510] sm:$0xf]
      %v1512 = vld [vmem:[%s1510 + $0x4] sm:$0xf]
      %v1513 = vld [vmem:[%s1510 + $0x8] sm:$0xf]
      %v1514 = vld [vmem:[%s1510 + $0xc] sm:$0xf]
      %v1515 = vld [vmem:[%s1510 + $0x10] sm:$0xf]
      %v1516 = vld [vmem:[%s1510 + $0x14] sm:$0xf]
      %v1523 = vunpack.c.l.b16 %v1511
      %v1524 = vunpack.c.l.b16 %v1512
      %v1525 = vunpack.c.l.b16 %v1513
      %v1526 = vunpack.c.l.b16 %v1514
      %v1527 = vunpack.c.l.b16 %v1515
      %v1528 = vunpack.c.l.b16 %v1516
      %v1529 = vpack.c.b16 %v1524, %v1523
      %v1530 = vpack.c.b16 %v1526, %v1525
      %v1531 = vpack.c.b16 %v1528, %v1527
      %v1537 = vunpack.c.l.b16 %v1508
      %v1538 = vunpack.c.l.b16 %v1509
      %v1539 = vpack.c.b16 %v1538, %v1537
      %1541 = vmatprep.subr.bf16.mxu0 0
      %1542 = vmatpush1.bf16.xpose.msra.mxu0 0
      %1543 = vmatprep.subr.bf16.mxu0 0
      %1544 = vmatpush1.bf16.xpose.msra.mxu0 0
      %1545 = vmatprep.subr.bf16.mxu0 0
      %1546 = vmatpush1.bf16.xpose.msra.mxu0 0
      %1547 = vmatprep.subr.bf16.mxu0 0
      %1548 = vmatpush1.bf16.xpose.msra.mxu0 0
      %1549 = vmatprep.subr.bf16.mxu0 0
      %1550 = vmatpush1.bf16.xpose.msra.mxu0 0
      %1551 = vmatprep.subr.bf16.mxu0 0
      %1552 = vmatpush1.bf16.xpose.msra.mxu0 0
      %1553 = vmatprep.subr.bf16.mxu0 0
      %1554 = vmatpush1.bf16.xpose.msra.mxu0 0
      %1555 = vmatprep.subr.bf16.mxu0 0
      %1556 = vmatpush1.bf16.xpose.msra.mxu0 %v1539
      %1557 = vmatprep.subr.bf16.mxu0 0
      %1558 = vmatpush2.bf16.xpose.msra.mxu0 0
      %1559 = vmatprep.subr.bf16.mxu0 0
      %1560 = vmatpush2.bf16.xpose.msra.mxu0 0
      %1561 = vmatprep.subr.bf16.mxu0 0
      %1562 = vmatpush2.bf16.xpose.msra.mxu0 0
      %1563 = vmatprep.subr.bf16.mxu0 0
      %1564 = vmatpush2.bf16.xpose.msra.mxu0 0
      %1565 = vmatprep.subr.bf16.mxu0 0
      %1566 = vmatpush2.bf16.xpose.msra.mxu0 0
      %1567 = vmatprep.subr.bf16.mxu0 0
      %1568 = vmatpush2.bf16.xpose.msra.mxu0 0
      %1569 = vmatprep.subr.bf16.mxu0 0
      %1570 = vmatpush2.bf16.xpose.msra.mxu0 0
      %1571 = vmatprep.subr.bf16.mxu0 0
      %1572 = vmatpush2.bf16.xpose.msra.mxu0 0
      %1573 = vmatprep.mubr.bf16.mxu0 0
      %1574 = vmatmul.mubr.bf16.gmra.mxu0 %v1529
      %v1575 = vpop.f32.mrf.mxu0
      %v1576 = vadd.f32 0.0, %v1575
      %v1577 = vpop.f32.mrf.mxu0
      %v1578 = vpop.f32.mrf.mxu0
      %v1579 = vadd.f32 0.0, %v1578
      %v1580 = vpop.f32.mrf.mxu0
      %1581 = vmatprep.mubr.bf16.mxu0 0
      %1582 = vmatmul.mubr.bf16.gmra.mxu0 %v1530
      %v1583 = vpop.f32.mrf.mxu0
      %v1584 = vadd.f32 0.0, %v1583
      %v1585 = vpop.f32.mrf.mxu0
      %v1586 = vpop.f32.mrf.mxu0
      %v1587 = vadd.f32 0.0, %v1586
      %v1588 = vpop.f32.mrf.mxu0
      %1589 = vmatprep.mubr.bf16.mxu0 0
      %1590 = vmatmul.mubr.bf16.gmra.mxu0 %v1531
      %v1591 = vpop.f32.mrf.mxu0
      %v1592 = vadd.f32 0.0, %v1591
      %v1593 = vpop.f32.mrf.mxu0
      %v1594 = vpop.f32.mrf.mxu0
      %v1595 = vadd.f32 0.0, %v1594
      %v1596 = vpop.f32.mrf.mxu0
      %1597 = vdwg.mxu0
      %v1598 = vadd.f32 %v1502, %v1576
      %v1599 = vadd.f32 %v1503, %v1579
      %v1600 = vadd.f32 %v1504, %v1584
      %v1601 = vadd.f32 %v1505, %v1587
      %v1602 = vadd.f32 %v1506, %v1592
      %v1603 = vadd.f32 %v1507, %v1595
      %v1604 = vld [vmem:[%s1098] sm:$0xf]
      %v1605 = vld [vmem:[%s1098 + $0x4] sm:$0xf]
      %v1606 = vld [vmem:[%s1098 + $0x8] sm:$0x1]
      %v1607 = vsel %vm501, %v1604, 0
      %v1608 = vsel %vm502, %v1605, 0
      %v1609 = vsel %vm503, %v1606, 0
      %s1610 = scalar_lea.vmem %s6, 120
      %v1611 = vld [vmem:[%s1610] sm:$0xf]
      %v1612 = vld [vmem:[%s1610 + $0x4] sm:$0xf]
      %v1613 = vld [vmem:[%s1610 + $0x8] sm:$0xf]
      %v1614 = vld [vmem:[%s1610 + $0xc] sm:$0xf]
      %v1615 = vld [vmem:[%s1610 + $0x10] sm:$0xf]
      %v1616 = vld [vmem:[%s1610 + $0x14] sm:$0xf]
      %v1623 = vunpack.c.l.b16 %v1611
      %v1624 = vunpack.c.l.b16 %v1612
      %v1625 = vunpack.c.l.b16 %v1613
      %v1626 = vunpack.c.l.b16 %v1614
      %v1627 = vunpack.c.l.b16 %v1615
      %v1628 = vunpack.c.l.b16 %v1616
      %v1629 = vpack.c.b16 %v1624, %v1623
      %v1630 = vpack.c.b16 %v1626, %v1625
      %v1631 = vpack.c.b16 %v1628, %v1627
      %v1638 = vunpack.c.l.b16 %v1607
      %v1639 = vunpack.c.l.b16 %v1608
      %v1640 = vunpack.c.l.b16 %v1609
      %v1641 = vpack.c.b16 %v1639, %v1638
      %v1642 = vpack.c.b16 %v1640, %v1640
      %v1644 = vshrl.u32 %v1641, 16
      %v1646 = vshll.u32 %v1641, 16
      %v1648 = vrot.slane %v1646, 1
      %v1649 = vor.u32 %v1644, %v1648
      %v1651 = vshll.u32 %v1642, 16
      %v1653 = vrot.slane %v1651, 1
      %v1654 = vsel %vm617, %v1649, %v1653
      %1656 = vmatprep.subr.bf16.mxu0 0
      %1657 = vmatpush1.bf16.xpose.msra.mxu0 0
      %1658 = vmatprep.subr.bf16.mxu0 0
      %1659 = vmatpush1.bf16.xpose.msra.mxu0 0
      %1660 = vmatprep.subr.bf16.mxu0 0
      %1661 = vmatpush1.bf16.xpose.msra.mxu0 0
      %1662 = vmatprep.subr.bf16.mxu0 0
      %1663 = vmatpush1.bf16.xpose.msra.mxu0 0
      %1664 = vmatprep.subr.bf16.mxu0 0
      %1665 = vmatpush1.bf16.xpose.msra.mxu0 0
      %1666 = vmatprep.subr.bf16.mxu0 0
      %1667 = vmatpush1.bf16.xpose.msra.mxu0 0
      %1668 = vmatprep.subr.bf16.mxu0 0
      %1669 = vmatpush1.bf16.xpose.msra.mxu0 0
      %1670 = vmatprep.subr.bf16.mxu0 0
      %1671 = vmatpush1.bf16.xpose.msra.mxu0 %v1654
      %1672 = vmatprep.subr.bf16.mxu0 0
      %1673 = vmatpush2.bf16.xpose.msra.mxu0 0
      %1674 = vmatprep.subr.bf16.mxu0 0
      %1675 = vmatpush2.bf16.xpose.msra.mxu0 0
      %1676 = vmatprep.subr.bf16.mxu0 0
      %1677 = vmatpush2.bf16.xpose.msra.mxu0 0
      %1678 = vmatprep.subr.bf16.mxu0 0
      %1679 = vmatpush2.bf16.xpose.msra.mxu0 0
      %1680 = vmatprep.subr.bf16.mxu0 0
      %1681 = vmatpush2.bf16.xpose.msra.mxu0 0
      %1682 = vmatprep.subr.bf16.mxu0 0
      %1683 = vmatpush2.bf16.xpose.msra.mxu0 0
      %1684 = vmatprep.subr.bf16.mxu0 0
      %1685 = vmatpush2.bf16.xpose.msra.mxu0 0
      %1686 = vmatprep.subr.bf16.mxu0 0
      %1687 = vmatpush2.bf16.xpose.msra.mxu0 0
      %1688 = vmatprep.mubr.bf16.mxu0 0
      %1689 = vmatmul.mubr.bf16.gmra.mxu0 %v1629
      %v1690 = vpop.f32.mrf.mxu0
      %v1691 = vadd.f32 0.0, %v1690
      %v1692 = vpop.f32.mrf.mxu0
      %v1693 = vpop.f32.mrf.mxu0
      %v1694 = vadd.f32 0.0, %v1693
      %v1695 = vpop.f32.mrf.mxu0
      %1696 = vmatprep.mubr.bf16.mxu0 0
      %1697 = vmatmul.mubr.bf16.gmra.mxu0 %v1630
      %v1698 = vpop.f32.mrf.mxu0
      %v1699 = vadd.f32 0.0, %v1698
      %v1700 = vpop.f32.mrf.mxu0
      %v1701 = vpop.f32.mrf.mxu0
      %v1702 = vadd.f32 0.0, %v1701
      %v1703 = vpop.f32.mrf.mxu0
      %1704 = vmatprep.mubr.bf16.mxu0 0
      %1705 = vmatmul.mubr.bf16.gmra.mxu0 %v1631
      %v1706 = vpop.f32.mrf.mxu0
      %v1707 = vadd.f32 0.0, %v1706
      %v1708 = vpop.f32.mrf.mxu0
      %v1709 = vpop.f32.mrf.mxu0
      %v1710 = vadd.f32 0.0, %v1709
      %v1711 = vpop.f32.mrf.mxu0
      %1712 = vdwg.mxu0
      %v1713 = vadd.f32 %v1598, %v1691
      %v1714 = vadd.f32 %v1599, %v1694
      %v1715 = vadd.f32 %v1600, %v1699
      %v1716 = vadd.f32 %v1601, %v1702
      %v1717 = vadd.f32 %v1602, %v1707
      %v1718 = vadd.f32 %v1603, %v1710
      %v1719 = vld [vmem:[#allocation3] sm:$0xc]
      %v1720 = vld [vmem:[#allocation3 + $0x8] sm:$0x3]
      %s1721 = scalar_lea.vmem %s6, 144
      %v1722 = vld [vmem:[%s1721] sm:$0xf]
      %v1723 = vld [vmem:[%s1721 + $0x4] sm:$0xf]
      %v1724 = vld [vmem:[%s1721 + $0x8] sm:$0xf]
      %v1725 = vld [vmem:[%s1721 + $0xc] sm:$0xf]
      %v1726 = vld [vmem:[%s1721 + $0x10] sm:$0xf]
      %v1727 = vld [vmem:[%s1721 + $0x14] sm:$0xf]
      %v1734 = vunpack.c.l.b16 %v1722
      %v1735 = vunpack.c.l.b16 %v1723
      %v1736 = vunpack.c.l.b16 %v1724
      %v1737 = vunpack.c.l.b16 %v1725
      %v1738 = vunpack.c.l.b16 %v1726
      %v1739 = vunpack.c.l.b16 %v1727
      %v1740 = vpack.c.b16 %v1735, %v1734
      %v1741 = vpack.c.b16 %v1737, %v1736
      %v1742 = vpack.c.b16 %v1739, %v1738
      %v1749 = vunpack.c.l.b16 %v1719
      %v1750 = vunpack.c.l.b16 %v1298
      %v1751 = vunpack.c.l.b16 %v1720
      %v1752 = vpack.c.b16 %v1750, %v1749
      %v1753 = vpack.c.b16 %v1751, %v1751
      %v1754 = vrot.slane %v1752, 2
      %v1755 = vrot.slane %v1753, 2
      %v1756 = vsel %vm746, %v1754, %v1755
      %1758 = vmatprep.subr.bf16.mxu0 0
      %1759 = vmatpush1.bf16.xpose.msra.mxu0 0
      %1760 = vmatprep.subr.bf16.mxu0 0
      %1761 = vmatpush1.bf16.xpose.msra.mxu0 0
      %1762 = vmatprep.subr.bf16.mxu0 0
      %1763 = vmatpush1.bf16.xpose.msra.mxu0 0
      %1764 = vmatprep.subr.bf16.mxu0 0
      %1765 = vmatpush1.bf16.xpose.msra.mxu0 0
      %1766 = vmatprep.subr.bf16.mxu0 0
      %1767 = vmatpush1.bf16.xpose.msra.mxu0 0
      %1768 = vmatprep.subr.bf16.mxu0 0
      %1769 = vmatpush1.bf16.xpose.msra.mxu0 0
      %1770 = vmatprep.subr.bf16.mxu0 0
      %1771 = vmatpush1.bf16.xpose.msra.mxu0 0
      %1772 = vmatprep.subr.bf16.mxu0 0
      %1773 = vmatpush1.bf16.xpose.msra.mxu0 %v1756
      %1774 = vmatprep.subr.bf16.mxu0 0
      %1775 = vmatpush2.bf16.xpose.msra.mxu0 0
      %1776 = vmatprep.subr.bf16.mxu0 0
      %1777 = vmatpush2.bf16.xpose.msra.mxu0 0
      %1778 = vmatprep.subr.bf16.mxu0 0
      %1779 = vmatpush2.bf16.xpose.msra.mxu0 0
      %1780 = vmatprep.subr.bf16.mxu0 0
      %1781 = vmatpush2.bf16.xpose.msra.mxu0 0
      %1782 = vmatprep.subr.bf16.mxu0 0
      %1783 = vmatpush2.bf16.xpose.msra.mxu0 0
      %1784 = vmatprep.subr.bf16.mxu0 0
      %1785 = vmatpush2.bf16.xpose.msra.mxu0 0
      %1786 = vmatprep.subr.bf16.mxu0 0
      %1787 = vmatpush2.bf16.xpose.msra.mxu0 0
      %1788 = vmatprep.subr.bf16.mxu0 0
      %1789 = vmatpush2.bf16.xpose.msra.mxu0 0
      %1790 = vmatprep.mubr.bf16.mxu0 0
      %1791 = vmatmul.mubr.bf16.gmra.mxu0 %v1740
      %v1792 = vpop.f32.mrf.mxu0
      %v1793 = vadd.f32 0.0, %v1792
      %v1794 = vpop.f32.mrf.mxu0
      %v1795 = vpop.f32.mrf.mxu0
      %v1796 = vadd.f32 0.0, %v1795
      %v1797 = vpop.f32.mrf.mxu0
      %1798 = vmatprep.mubr.bf16.mxu0 0
      %1799 = vmatmul.mubr.bf16.gmra.mxu0 %v1741
      %v1800 = vpop.f32.mrf.mxu0
      %v1801 = vadd.f32 0.0, %v1800
      %v1802 = vpop.f32.mrf.mxu0
      %v1803 = vpop.f32.mrf.mxu0
      %v1804 = vadd.f32 0.0, %v1803
      %v1805 = vpop.f32.mrf.mxu0
      %1806 = vmatprep.mubr.bf16.mxu0 0
      %1807 = vmatmul.mubr.bf16.gmra.mxu0 %v1742
      %v1808 = vpop.f32.mrf.mxu0
      %v1809 = vadd.f32 0.0, %v1808
      %v1810 = vpop.f32.mrf.mxu0
      %v1811 = vpop.f32.mrf.mxu0
      %v1812 = vadd.f32 0.0, %v1811
      %v1813 = vpop.f32.mrf.mxu0
      %1814 = vdwg.mxu0
      %v1815 = vadd.f32 %v1713, %v1793
      %v1816 = vadd.f32 %v1714, %v1796
      %v1817 = vadd.f32 %v1715, %v1801
      %v1818 = vadd.f32 %v1716, %v1804
      %v1819 = vadd.f32 %v1717, %v1809
      %v1820 = vadd.f32 %v1718, %v1812
      %v1821 = vld [vmem:[%s1084] sm:$0xc]
      %v1822 = vld [vmem:[%s1084 + $0x4] sm:$0xf]
      %v1823 = vld [vmem:[%s1084 + $0x8] sm:$0x3]
      %s1824 = scalar_lea.vmem %s6, 168
      %v1825 = vld [vmem:[%s1824] sm:$0xf]
      %v1826 = vld [vmem:[%s1824 + $0x4] sm:$0xf]
      %v1827 = vld [vmem:[%s1824 + $0x8] sm:$0xf]
      %v1828 = vld [vmem:[%s1824 + $0xc] sm:$0xf]
      %v1829 = vld [vmem:[%s1824 + $0x10] sm:$0xf]
      %v1830 = vld [vmem:[%s1824 + $0x14] sm:$0xf]
      %v1837 = vunpack.c.l.b16 %v1825
      %v1838 = vunpack.c.l.b16 %v1826
      %v1839 = vunpack.c.l.b16 %v1827
      %v1840 = vunpack.c.l.b16 %v1828
      %v1841 = vunpack.c.l.b16 %v1829
      %v1842 = vunpack.c.l.b16 %v1830
      %v1843 = vpack.c.b16 %v1838, %v1837
      %v1844 = vpack.c.b16 %v1840, %v1839
      %v1845 = vpack.c.b16 %v1842, %v1841
      %v1852 = vunpack.c.l.b16 %v1821
      %v1853 = vunpack.c.l.b16 %v1822
      %v1854 = vunpack.c.l.b16 %v1823
      %v1855 = vpack.c.b16 %v1853, %v1852
      %v1856 = vpack.c.b16 %v1854, %v1854
      %v1857 = vrot.slane %v1855, 2
      %v1858 = vrot.slane %v1856, 2
      %v1859 = vsel %vm746, %v1857, %v1858
      %1861 = vmatprep.subr.bf16.mxu0 0
      %1862 = vmatpush1.bf16.xpose.msra.mxu0 0
      %1863 = vmatprep.subr.bf16.mxu0 0
      %1864 = vmatpush1.bf16.xpose.msra.mxu0 0
      %1865 = vmatprep.subr.bf16.mxu0 0
      %1866 = vmatpush1.bf16.xpose.msra.mxu0 0
      %1867 = vmatprep.subr.bf16.mxu0 0
      %1868 = vmatpush1.bf16.xpose.msra.mxu0 0
      %1869 = vmatprep.subr.bf16.mxu0 0
      %1870 = vmatpush1.bf16.xpose.msra.mxu0 0
      %1871 = vmatprep.subr.bf16.mxu0 0
      %1872 = vmatpush1.bf16.xpose.msra.mxu0 0
      %1873 = vmatprep.subr.bf16.mxu0 0
      %1874 = vmatpush1.bf16.xpose.msra.mxu0 0
      %1875 = vmatprep.subr.bf16.mxu0 0
      %1876 = vmatpush1.bf16.xpose.msra.mxu0 %v1859
      %1877 = vmatprep.subr.bf16.mxu0 0
      %1878 = vmatpush2.bf16.xpose.msra.mxu0 0
      %1879 = vmatprep.subr.bf16.mxu0 0
      %1880 = vmatpush2.bf16.xpose.msra.mxu0 0
      %1881 = vmatprep.subr.bf16.mxu0 0
      %1882 = vmatpush2.bf16.xpose.msra.mxu0 0
      %1883 = vmatprep.subr.bf16.mxu0 0
      %1884 = vmatpush2.bf16.xpose.msra.mxu0 0
      %1885 = vmatprep.subr.bf16.mxu0 0
      %1886 = vmatpush2.bf16.xpose.msra.mxu0 0
      %1887 = vmatprep.subr.bf16.mxu0 0
      %1888 = vmatpush2.bf16.xpose.msra.mxu0 0
      %1889 = vmatprep.subr.bf16.mxu0 0
      %1890 = vmatpush2.bf16.xpose.msra.mxu0 0
      %1891 = vmatprep.subr.bf16.mxu0 0
      %1892 = vmatpush2.bf16.xpose.msra.mxu0 0
      %1893 = vmatprep.mubr.bf16.mxu0 0
      %1894 = vmatmul.mubr.bf16.gmra.mxu0 %v1843
      %v1895 = vpop.f32.mrf.mxu0
      %v1896 = vadd.f32 0.0, %v1895
      %v1897 = vpop.f32.mrf.mxu0
      %v1898 = vpop.f32.mrf.mxu0
      %v1899 = vadd.f32 0.0, %v1898
      %v1900 = vpop.f32.mrf.mxu0
      %1901 = vmatprep.mubr.bf16.mxu0 0
      %1902 = vmatmul.mubr.bf16.gmra.mxu0 %v1844
      %v1903 = vpop.f32.mrf.mxu0
      %v1904 = vadd.f32 0.0, %v1903
      %v1905 = vpop.f32.mrf.mxu0
      %v1906 = vpop.f32.mrf.mxu0
      %v1907 = vadd.f32 0.0, %v1906
      %v1908 = vpop.f32.mrf.mxu0
      %1909 = vmatprep.mubr.bf16.mxu0 0
      %1910 = vmatmul.mubr.bf16.gmra.mxu0 %v1845
      %v1911 = vpop.f32.mrf.mxu0
      %v1912 = vadd.f32 0.0, %v1911
      %v1913 = vpop.f32.mrf.mxu0
      %v1914 = vpop.f32.mrf.mxu0
      %v1915 = vadd.f32 0.0, %v1914
      %v1916 = vpop.f32.mrf.mxu0
      %1917 = vdwg.mxu0
      %v1918 = vadd.f32 %v1815, %v1896
      %v1919 = vadd.f32 %v1816, %v1899
      %v1920 = vadd.f32 %v1817, %v1904
      %v1921 = vadd.f32 %v1818, %v1907
      %v1922 = vadd.f32 %v1819, %v1912
      %v1923 = vadd.f32 %v1820, %v1915
      %v1924 = vld [vmem:[#allocation3 + $0x8] sm:$0x7]
      %v1925 = vsel %vm521, %v1719, 0
      %v1926 = vsel %vm522, %v1298, 0
      %v1927 = vsel %vm523, %v1924, 0
      %s1928 = scalar_lea.vmem %s6, 192
      %v1929 = vld [vmem:[%s1928] sm:$0xf]
      %v1930 = vld [vmem:[%s1928 + $0x4] sm:$0xf]
      %v1931 = vld [vmem:[%s1928 + $0x8] sm:$0xf]
      %v1932 = vld [vmem:[%s1928 + $0xc] sm:$0xf]
      %v1933 = vld [vmem:[%s1928 + $0x10] sm:$0xf]
      %v1934 = vld [vmem:[%s1928 + $0x14] sm:$0xf]
      %v1941 = vunpack.c.l.b16 %v1929
      %v1942 = vunpack.c.l.b16 %v1930
      %v1943 = vunpack.c.l.b16 %v1931
      %v1944 = vunpack.c.l.b16 %v1932
      %v1945 = vunpack.c.l.b16 %v1933
      %v1946 = vunpack.c.l.b16 %v1934
      %v1947 = vpack.c.b16 %v1942, %v1941
      %v1948 = vpack.c.b16 %v1944, %v1943
      %v1949 = vpack.c.b16 %v1946, %v1945
      %v1956 = vunpack.c.l.b16 %v1925
      %v1957 = vunpack.c.l.b16 %v1926
      %v1958 = vunpack.c.l.b16 %v1927
      %v1959 = vpack.c.b16 %v1957, %v1956
      %v1960 = vpack.c.b16 %v1958, %v1958
      %v1962 = vshrl.u32 %v1959, 16
      %v1964 = vrot.slane %v1962, 2
      %v1965 = vshll.u32 %v1959, 16
      %v1967 = vrot.slane %v1965, 3
      %v1968 = vor.u32 %v1964, %v1967
      %v1970 = vshrl.u32 %v1960, 16
      %v1972 = vrot.slane %v1970, 2
      %v1973 = vshll.u32 %v1960, 16
      %v1975 = vrot.slane %v1973, 3
      %v1976 = vor.u32 %v1972, %v1975
      %v1977 = vsel %vm868, %v1968, %v1976
      %1979 = vmatprep.subr.bf16.mxu0 0
      %1980 = vmatpush1.bf16.xpose.msra.mxu0 0
      %1981 = vmatprep.subr.bf16.mxu0 0
      %1982 = vmatpush1.bf16.xpose.msra.mxu0 0
      %1983 = vmatprep.subr.bf16.mxu0 0
      %1984 = vmatpush1.bf16.xpose.msra.mxu0 0
      %1985 = vmatprep.subr.bf16.mxu0 0
      %1986 = vmatpush1.bf16.xpose.msra.mxu0 0
      %1987 = vmatprep.subr.bf16.mxu0 0
      %1988 = vmatpush1.bf16.xpose.msra.mxu0 0
      %1989 = vmatprep.subr.bf16.mxu0 0
      %1990 = vmatpush1.bf16.xpose.msra.mxu0 0
      %1991 = vmatprep.subr.bf16.mxu0 0
      %1992 = vmatpush1.bf16.xpose.msra.mxu0 0
      %1993 = vmatprep.subr.bf16.mxu0 0
      %1994 = vmatpush1.bf16.xpose.msra.mxu0 %v1977
      %1995 = vmatprep.subr.bf16.mxu0 0
      %1996 = vmatpush2.bf16.xpose.msra.mxu0 0
      %1997 = vmatprep.subr.bf16.mxu0 0
      %1998 = vmatpush2.bf16.xpose.msra.mxu0 0
      %1999 = vmatprep.subr.bf16.mxu0 0
      %2000 = vmatpush2.bf16.xpose.msra.mxu0 0
      %2001 = vmatprep.subr.bf16.mxu0 0
      %2002 = vmatpush2.bf16.xpose.msra.mxu0 0
      %2003 = vmatprep.subr.bf16.mxu0 0
      %2004 = vmatpush2.bf16.xpose.msra.mxu0 0
      %2005 = vmatprep.subr.bf16.mxu0 0
      %2006 = vmatpush2.bf16.xpose.msra.mxu0 0
      %2007 = vmatprep.subr.bf16.mxu0 0
      %2008 = vmatpush2.bf16.xpose.msra.mxu0 0
      %2009 = vmatprep.subr.bf16.mxu0 0
      %2010 = vmatpush2.bf16.xpose.msra.mxu0 0
      %2011 = vmatprep.mubr.bf16.mxu0 0
      %2012 = vmatmul.mubr.bf16.gmra.mxu0 %v1947
      %v2013 = vpop.f32.mrf.mxu0
      %v2014 = vadd.f32 0.0, %v2013
      %v2015 = vpop.f32.mrf.mxu0
      %v2016 = vpop.f32.mrf.mxu0
      %v2017 = vadd.f32 0.0, %v2016
      %v2018 = vpop.f32.mrf.mxu0
      %2019 = vmatprep.mubr.bf16.mxu0 0
      %2020 = vmatmul.mubr.bf16.gmra.mxu0 %v1948
      %v2021 = vpop.f32.mrf.mxu0
      %v2022 = vadd.f32 0.0, %v2021
      %v2023 = vpop.f32.mrf.mxu0
      %v2024 = vpop.f32.mrf.mxu0
      %v2025 = vadd.f32 0.0, %v2024
      %v2026 = vpop.f32.mrf.mxu0
      %2027 = vmatprep.mubr.bf16.mxu0 0
      %2028 = vmatmul.mubr.bf16.gmra.mxu0 %v1949
      %v2029 = vpop.f32.mrf.mxu0
      %v2030 = vadd.f32 0.0, %v2029
      %v2031 = vpop.f32.mrf.mxu0
      %v2032 = vpop.f32.mrf.mxu0
      %v2033 = vadd.f32 0.0, %v2032
      %v2034 = vpop.f32.mrf.mxu0
      %2035 = vdwg.mxu0
      %v2036 = vadd.f32 %v1918, %v2014
      %v2037 = vadd.f32 %v1919, %v2017
      %v2038 = vadd.f32 %v1920, %v2022
      %v2039 = vadd.f32 %v1921, %v2025
      %v2040 = vadd.f32 %v1922, %v2030
      %v2041 = vadd.f32 %v1923, %v2033
      %v2042 = vsub.f32 0.0, %v2036
      %v2043 = vsub.f32 0.0, %v2037
      %v2044 = vsub.f32 0.0, %v2038
      %v2045 = vsub.f32 0.0, %v2039
      %v2046 = vsub.f32 0.0, %v2040
      %v2047 = vsub.f32 0.0, %v2041
      %v2048 = vmul.f32 %v2042, 1.442695
      %v2049 = vpow.pop %v2048
      %v2050 = vmul.f32 %v2043, 1.442695
      %v2051 = vpow.pop %v2050
      %v2052 = vmul.f32 %v2044, 1.442695
      %v2053 = vpow.pop %v2052
      %v2054 = vmul.f32 %v2045, 1.442695
      %v2055 = vpow.pop %v2054
      %v2056 = vmul.f32 %v2046, 1.442695
      %v2057 = vpow.pop %v2056
      %v2058 = vmul.f32 %v2047, 1.442695
      %v2059 = vpow.pop %v2058
      %v2060 = vadd.f32 %v2049, 1.0
      %v2061 = vadd.f32 %v2051, 1.0
      %v2062 = vadd.f32 %v2053, 1.0
      %v2063 = vadd.f32 %v2055, 1.0
      %v2064 = vadd.f32 %v2057, 1.0
      %v2065 = vadd.f32 %v2059, 1.0
      %v2066 = vrcp.pop %v2060
      %v2067 = vrcp.pop %v2061
      %v2068 = vrcp.pop %v2062
      %v2069 = vrcp.pop %v2063
      %v2070 = vrcp.pop %v2064
      %v2071 = vrcp.pop %v2065
      %vm2072 = vcmask 130048
      %2073 = vst.msk [vmem:[%s278] sm:$0xff] %vm2072, %v2066
      %2074 = vst.msk [vmem:[%s278 + $0x8] sm:$0xff] %vm2072, %v2067
      %2075 = vst.msk [vmem:[%s278 + $0x10] sm:$0xff] %vm2072, %v2068
      %2076 = vst.msk [vmem:[%s278 + $0x18] sm:$0xff] %vm2072, %v2069
      %2077 = vst.msk [vmem:[%s278 + $0x20] sm:$0xff] %vm2072, %v2070
      %2078 = vst.msk [vmem:[%s278 + $0x28] sm:$0xff] %vm2072, %v2071
      %p2079 = scmp.lt.s32.totalorder %s18, 1
      %s2080 = scalar_select %p2079, %s18, 1
      %s2081 = smul.addr %s2080, 6
      %s2082 = smul.addr %s2081, 8
      %s2083 = scalar_lea.vmem %s7, %s2082
      // Predicated region
      $region49: #{denoiser_forward.1} parent=47 // pred_check
        %p2084 = pneg %p188
      $region50: #{denoiser_forward.1} parent=47 // pred_check_branch
        %2086 = sbr.rel (%p2084) target = $region52
      $region51: #{denoiser_forward.1} parent=47 // pred_region
        _
      $region52: #{denoiser_forward.1} parent=47 // pred_fallthru
        _
    $region48: #{denoiser_forward.1} parent=5 // pred_fallthru
      _
    %p2087 = scmp.le.s32.totalorder 2, %s13
    // Predicated region
    $region53: #{denoiser_forward.1} parent=5 // pred_check
      %p2088 = pneg %p2087
    $region54: #{denoiser_forward.1} parent=5 // pred_check_branch
      %2090 = sbr.rel (%p2088) target = $region56
    $region55: #{denoiser_forward.1} parent=5 // pred_region
      %s2091 = ssub.s32 %s13, 2
      // Predicated region
      $region57: #{denoiser_forward.1} parent=55 // pred_check
        %p2092 = pneg %p194
      $region58: #{denoiser_forward.1} parent=55 // pred_check_branch
        %2094 = sbr.rel (%p2092) target = $region60
      $region59: #{denoiser_forward.1} parent=55 // pred_region
        %p2095 = scmp.lt.s32.totalorder %s19, 1
        %s2096 = scalar_select %p2095, %s19, 1
        %s2097 = smul.addr %s2096, 6
        %s2098 = smul.addr %s2097, 8
        %s2099 = scalar_lea.vmem %s7, %s2098
      $region60: #{denoiser_forward.1} parent=55 // pred_fallthru
        _
    $region56: #{denoiser_forward.1} parent=5 // pred_fallthru
      _
  $region6: #{denoiser_forward.1} parent=0 // loop_footer
    %s17 = sadd.s32 1, %s13
  $region7: #{denoiser_forward.1} parent=0 // loop_footer_branch
    %12 = sbr.rel target = $region3
  $region8: #{denoiser_forward.1} parent=0 // loop_exit
    _

</llo_original>
